<compile_context>
chip_gen: v5e
topology: v5e:2x2
jax: 0.10.0
libtpu: 0.0.40
codegen_flags: <defaults>
</compile_context>

<pallas_src>
import jax
import jax.numpy as jnp
from jax.experimental import pallas as pl
from jax.experimental.pallas import tpu as pltpu

EPS = 1e-5  # torch.nn.LayerNorm default eps


def _layer_norm(x, gamma, beta):
    mu = jnp.mean(x, axis=-1, keepdims=True)
    var = jnp.mean((x - mu) ** 2, axis=-1, keepdims=True)
    return (x - mu) * jax.lax.rsqrt(var + EPS) * gamma + beta


def _pick_tile(n, cap, multiple):
    """Largest divisor of n that is <= cap and (== n or a multiple of `multiple`)."""
    cap = min(n, cap)
    for t in range(cap, 0, -1):
        if n % t == 0 and (t == n or t % multiple == 0):
            return t
    # TODO(synk): ragged fallback loads the full axis; fine for modest sizes.
    return n


# ---------------------------------------------------------------------------
# Kernel 1: LayerNorm + fused 5-way projection + gating + mask.
#   writes a, b channel-major (bf16), gate row-major (f32) and per-tile
#   (sum, sumsq) statistics for the global std.
# ---------------------------------------------------------------------------
def proj_kernel(z_ref, mask_ref, lng_ref, lnb_ref, w_ref, bias_ref,
                a_out, b_out, gate_out, stats_out):
    C = z_ref.shape[-1]
    x = z_ref[...].astype(jnp.float32)                      # (rt, C)
    ln = _layer_norm(x, lng_ref[...], lnb_ref[...])
    m = mask_ref[...]                                       # (rt, 1) -> broadcast

    # single MXU launch with a lane-dense 5C output dimension
    y = jnp.dot(ln, w_ref[...], preferred_element_type=jnp.float32) + bias_ref[...]
    pa = y[:, 0 * C:1 * C]
    ga = y[:, 1 * C:2 * C]
    pb = y[:, 2 * C:3 * C]
    gb = y[:, 3 * C:4 * C]
    g = y[:, 4 * C:5 * C]

    a = pa * jax.nn.sigmoid(ga) * m
    b = pb * jax.nn.sigmoid(gb) * m

    # channel-major writes (fused transpose on the otherwise idle XLU)
    a_out[...] = a.T.astype(a_out.dtype)
    b_out[...] = b.T.astype(b_out.dtype)
    gate_out[...] = jax.nn.sigmoid(g)

    # per-tile sums for the global unbiased std, packed into lanes 0..3
    lane = jax.lax.broadcasted_iota(jnp.int32, (1, 128), 1)
    stats_out[...] = (jnp.where(lane == 0, jnp.sum(a), 0.0)
                      + jnp.where(lane == 1, jnp.sum(a * a), 0.0)
                      + jnp.where(lane == 2, jnp.sum(b), 0.0)
                      + jnp.where(lane == 3, jnp.sum(b * b), 0.0))


# ---------------------------------------------------------------------------
# Kernel 2: triangle einsum '... i k c, ... j k c -> ... i j c' on the
# channel-major view: channel-batched (ti, N) @ (N, tj)^T MXU matmul.
# The global 1/(a_std * b_std) scale comes in via SMEM scalar prefetch and is
# applied to the f32 accumulator (exact by bilinearity of the einsum).
# ---------------------------------------------------------------------------
def tri_kernel(scales_ref, a_ref, b_ref, o_ref):
    s = scales_ref[0] * scales_ref[1]
    acc = jax.lax.dot_general(
        a_ref[...], b_ref[...],
        dimension_numbers=(((2,), (2,)), ((0,), (0,))),
        preferred_element_type=jnp.float32)
    o_ref[...] = acc * s


# ---------------------------------------------------------------------------
# Kernel 3: gate * proj_o(LayerNorm_out(t)), consuming t channel-major
# (fused back-transpose), writing channels-last.
# ---------------------------------------------------------------------------
def out_kernel(t_ref, gate_ref, lng_ref, lnb_ref, wo_ref, bo_ref, o_ref):
    t = t_ref[...].T                                        # (C, rt) -> (rt, C)
    ln = _layer_norm(t, lng_ref[...], lnb_ref[...])
    o_ref[...] = gate_ref[...] * (
        jnp.dot(ln, wo_ref[...], preferred_element_type=jnp.float32) + bo_ref[...])


# ---------------------------------------------------------------------------
# Wrapper
# ---------------------------------------------------------------------------
def triangle_multiplication_outgoing(z, params, pair_mask=None,
                                     row_tile_cap=512, tri_tile_cap=256,
                                     ct_cap=8):
    B, N, N2, C = z.shape
    assert N == N2, "pair representation must be square"
    NN = N * N
    rows = B * NN

    # tiles: lane dims must be multiples of 128 or the full axis
    row_tile = _pick_tile(NN, row_tile_cap, 128)
    tile_i = _pick_tile(N, tri_tile_cap, 8)
    tile_j = _pick_tile(N, tri_tile_cap, 128)   # v5e: pass tri_tile_cap=128
    ct = _pick_tile(C, ct_cap, 1)
    num_r = NN // row_tile

    z3 = z.reshape(B, NN, C).astype(jnp.float32)
    if pair_mask is None:
        mask3 = jnp.ones((B, NN, 1), jnp.float32)
    else:
        mask3 = pair_mask.reshape(B, NN, 1).astype(jnp.float32)

    # fuse the five projections into one (C, 5C) weight / (1, 5C) bias
    W = jnp.concatenate([params["wa"], params["wga"], params["wb"],
                         params["wgb"], params["wg"]], axis=1)
    Bv = jnp.concatenate([params["ba"], params["bga"], params["bb"],
                          params["bgb"], params["bg"]], axis=1)

    row_spec = pl.BlockSpec((None, row_tile, C), lambda b, r: (b, r, 0))
    cm_spec = pl.BlockSpec((None, C, row_tile), lambda b, r: (b, 0, r))
    mask_spec = pl.BlockSpec((None, row_tile, 1), lambda b, r: (b, r, 0))
    vecC_spec = pl.BlockSpec((1, C), lambda b, r: (0, 0))
    wfused_spec = pl.BlockSpec((C, 5 * C), lambda b, r: (0, 0))
    bfused_spec = pl.BlockSpec((1, 5 * C), lambda b, r: (0, 0))
    stats_spec = pl.BlockSpec((None, None, 1, 128), lambda b, r: (b, r, 0, 0))

    a_cm, b_cm, gate, stats = pl.pallas_call(
        proj_kernel,
        out_shape=(jax.ShapeDtypeStruct((B, C, NN), jnp.bfloat16),
                   jax.ShapeDtypeStruct((B, C, NN), jnp.bfloat16),
                   jax.ShapeDtypeStruct((B, NN, C), jnp.float32),
                   jax.ShapeDtypeStruct((B, num_r, 1, 128), jnp.float32)),
        grid=(B, num_r),
        in_specs=[row_spec, mask_spec, vecC_spec, vecC_spec,
                  wfused_spec, bfused_spec],
        out_specs=(cm_spec, cm_spec, row_spec, stats_spec),
        compiler_params=pltpu.CompilerParams(
            dimension_semantics=("parallel", "parallel")),
    )(z3, mask3, params["ln_g"], params["ln_b"], W, Bv)

    # global unbiased std (torch .std()) from the tiny per-tile partial sums
    n_el = jnp.float32(rows * C)
    sa, ssa = jnp.sum(stats[..., 0]), jnp.sum(stats[..., 1])
    sb, ssb = jnp.sum(stats[..., 2]), jnp.sum(stats[..., 3])
    a_std = jnp.sqrt(jnp.maximum((ssa - sa * sa / n_el) / (n_el - 1.0), 0.0))
    b_std = jnp.sqrt(jnp.maximum((ssb - sb * sb / n_el) / (n_el - 1.0), 0.0))
    do_div = (a_std != 0.0) & (b_std != 0.0)
    inv_a = 1.0 / jnp.where(do_div, a_std, 1.0)
    inv_b = 1.0 / jnp.where(do_div, b_std, 1.0)
    scales = jnp.stack([inv_a, inv_b]).astype(jnp.float32)   # (2,) -> SMEM

    a4 = a_cm.reshape(B, C, N, N)   # [b, c, i, k]  (free reshape)
    b4 = b_cm.reshape(B, C, N, N)   # [b, c, j, k]

    t_cm = pl.pallas_call(
        tri_kernel,
        out_shape=jax.ShapeDtypeStruct((B, C, N, N), jnp.float32),
        grid_spec=pltpu.PrefetchScalarGridSpec(
            num_scalar_prefetch=1,
            grid=(B, C // ct, N // tile_i, N // tile_j),
            in_specs=[
                pl.BlockSpec((None, ct, tile_i, N),
                             lambda b, c, i, j, s: (b, c, i, 0)),
                pl.BlockSpec((None, ct, tile_j, N),
                             lambda b, c, i, j, s: (b, c, j, 0)),
            ],
            out_specs=pl.BlockSpec((None, ct, tile_i, tile_j),
                                   lambda b, c, i, j, s: (b, c, i, j)),
        ),
        compiler_params=pltpu.CompilerParams(
            dimension_semantics=("parallel", "parallel", "parallel", "parallel"),
            vmem_limit_bytes=48 * 1024 * 1024),
    )(scales, a4, b4)

    t_cm2 = t_cm.reshape(B, C, NN)  # free reshape; consumed channel-major

    tcm_spec = pl.BlockSpec((None, C, row_tile), lambda b, r: (b, 0, r))
    wo_spec = pl.BlockSpec((C, C), lambda b, r: (0, 0))
    o3 = pl.pallas_call(
        out_kernel,
        out_shape=jax.ShapeDtypeStruct((B, NN, C), jnp.float32),
        grid=(B, num_r),
        in_specs=[tcm_spec, row_spec, vecC_spec, vecC_spec, wo_spec, vecC_spec],
        out_specs=row_spec,
        compiler_params=pltpu.CompilerParams(
            dimension_semantics=("parallel", "parallel")),
    )(t_cm2, gate, params["lno_g"], params["lno_b"], params["wo"], params["bo"])

    return o3.reshape(B, N, N, C)


# ---------------------------------------------------------------------------
# Pure-JAX reference (mirrors the PyTorch forward exactly)
# ---------------------------------------------------------------------------
def reference(z, params, pair_mask=None):
    B, N, _, C = z.shape
    if pair_mask is None:
        pair_mask = jnp.ones((B, N, N), jnp.float32)
    pm = pair_mask[..., None]
    zn = _layer_norm(z.astype(jnp.float32), params["ln_g"], params["ln_b"])
    a = (zn @ params["wa"] + params["ba"]) * jax.nn.sigmoid(zn @ params["wga"] + params["bga"]) * pm
    b = (zn @ params["wb"] + params["bb"]) * jax.nn.sigmoid(zn @ params["wgb"] + params["bgb"]) * pm
    a_std = jnp.std(a, ddof=1)
    b_std = jnp.std(b, ddof=1)
    do_div = (a_std != 0.0) & (b_std != 0.0)
    a = a / jnp.where(do_div, a_std, 1.0)
    b = b / jnp.where(do_div, b_std, 1.0)
    gate = jax.nn.sigmoid(zn @ params["wg"] + params["bg"])
    t = jnp.einsum("bikc,bjkc->bijc", a, b)
    o = gate * (_layer_norm(t, params["lno_g"], params["lno_b"]) @ params["wo"] + params["bo"])
    return o


def make_params(key, C):
    ks = jax.random.split(key, 12)

    def w(k):
        return jax.random.normal(k, (C, C), jnp.float32) * 0.1

    def v(k):
        return jax.random.normal(k, (1, C), jnp.float32) * 0.1

    return dict(
        # torch LayerNorm default init: weight=1, bias=0
        ln_g=jnp.ones((1, C), jnp.float32), ln_b=jnp.zeros((1, C), jnp.float32),
        lno_g=jnp.ones((1, C), jnp.float32), lno_b=jnp.zeros((1, C), jnp.float32),
        wa=w(ks[0]), ba=v(ks[1]),
        wga=w(ks[2]), bga=v(ks[3]),
        wb=w(ks[4]), bb=v(ks[5]),
        wgb=w(ks[6]), bgb=v(ks[7]),
        wg=w(ks[8]), bg=v(ks[9]),
        wo=w(ks[10]), bo=v(ks[11]),
    )


if __name__ == "__main__":
    B, N, C = 2, 8, 32
    key = jax.random.PRNGKey(0)
    kz, kp, km = jax.random.split(key, 3)
    z = jax.random.normal(kz, (B, N, N, C), jnp.float32)
    params = make_params(kp, C)

    # no mask
    out = jax.block_until_ready(triangle_multiplication_outgoing(z, params))
    ref = jax.block_until_ready(reference(z, params))
    assert out.shape == (B, N, N, C)
    err = float(jnp.max(jnp.abs(out - ref)))
    # tolerance accounts for bf16 MXU inputs in the triangle einsum
    assert jnp.allclose(out, ref, rtol=3e-2, atol=3e-2), \
        "mismatch vs reference (no mask): max abs diff = %f" % err

    # with a pair mask
    pair_mask = (jax.random.uniform(km, (B, N, N)) > 0.3).astype(jnp.float32)
    out_m = jax.block_until_ready(
        triangle_multiplication_outgoing(z, params, pair_mask=pair_mask))
    ref_m = jax.block_until_ready(reference(z, params, pair_mask=pair_mask))
    err_m = float(jnp.max(jnp.abs(out_m - ref_m)))
    assert jnp.allclose(out_m, ref_m, rtol=3e-2, atol=3e-2), \
        "mismatch vs reference (mask): max abs diff = %f" % err_m

    print("KERNEL_OK")
</pallas_src>

<mosaic_0001>
module attributes {stable_mosaic.version = 11 : i64} {
  func.func @proj_kernel(%arg0: i32, %arg1: i32, %arg2: memref<1x64x32xf32, #tpu.memory_space<vmem>>, %arg3: memref<1x64x1xf32, #tpu.memory_space<vmem>>, %arg4: memref<1x32xf32, #tpu.memory_space<vmem>>, %arg5: memref<1x32xf32, #tpu.memory_space<vmem>>, %arg6: memref<32x160xf32, #tpu.memory_space<vmem>>, %arg7: memref<1x160xf32, #tpu.memory_space<vmem>>, %arg8: memref<1x32x64xbf16, #tpu.memory_space<vmem>>, %arg9: memref<1x32x64xbf16, #tpu.memory_space<vmem>>, %arg10: memref<1x64x32xf32, #tpu.memory_space<vmem>>, %arg11: memref<1x1x1x128xf32, #tpu.memory_space<vmem>>) attributes {dimension_semantics = [#tpu.dimension_semantics<parallel>, #tpu.dimension_semantics<parallel>], iteration_bounds = array<i64: 2, 1>, scalar_prefetch = 0 : i64, scratch_operands = 0 : i64, tpu.core_type = #tpu.core_type<tc>, window_params = [{transform_indices = @transform_0, window_bounds = array<i64: 1, 64, 32>}, {transform_indices = @transform_1, window_bounds = array<i64: 1, 64, 1>}, {pipeline_mode = #tpu.pipeline_mode<synchronous>, transform_indices = @transform_2, window_bounds = array<i64: 1, 32>}, {pipeline_mode = #tpu.pipeline_mode<synchronous>, transform_indices = @transform_3, window_bounds = array<i64: 1, 32>}, {pipeline_mode = #tpu.pipeline_mode<synchronous>, transform_indices = @transform_4, window_bounds = array<i64: 32, 160>}, {pipeline_mode = #tpu.pipeline_mode<synchronous>, transform_indices = @transform_5, window_bounds = array<i64: 1, 160>}, {transform_indices = @transform_6, window_bounds = array<i64: 1, 32, 64>}, {transform_indices = @transform_7, window_bounds = array<i64: 1, 32, 64>}, {transform_indices = @transform_8, window_bounds = array<i64: 1, 64, 32>}, {transform_indices = @transform_9, window_bounds = array<i64: 1, 1, 1, 128>}]} {
    %c0 = arith.constant 0 : index
    %c0_0 = arith.constant 0 : index
    %c0_1 = arith.constant 0 : index
    %0 = vector.load %arg2[%c0, %c0_0, %c0_1] : memref<1x64x32xf32, #tpu.memory_space<vmem>>, vector<1x64x32xf32>
    %1 = vector.shape_cast %0 : vector<1x64x32xf32> to vector<64x32xf32>
    %c0_2 = arith.constant 0 : index
    %c0_3 = arith.constant 0 : index
    %2 = vector.load %arg4[%c0_2, %c0_3] : memref<1x32xf32, #tpu.memory_space<vmem>>, vector<1x32xf32>
    %c0_4 = arith.constant 0 : index
    %c0_5 = arith.constant 0 : index
    %3 = vector.load %arg5[%c0_4, %c0_5] : memref<1x32xf32, #tpu.memory_space<vmem>>, vector<1x32xf32>
    %cst = arith.constant dense<0.000000e+00> : vector<64xf32>
    %4 = vector.multi_reduction <add>, %1, %cst [1] : vector<64x32xf32> to vector<64xf32>
    %5 = vector.shape_cast %4 : vector<64xf32> to vector<64x1xf32>
    %cst_6 = arith.constant 3.200000e+01 : f32
    %6 = vector.broadcast %cst_6 : f32 to vector<64x1xf32>
    %7 = arith.divf %5, %6 : vector<64x1xf32>
    %8 = vector.broadcast %7 : vector<64x1xf32> to vector<64x32xf32>
    %9 = arith.subf %1, %8 : vector<64x32xf32>
    %10 = arith.mulf %9, %9 : vector<64x32xf32>
    %cst_7 = arith.constant dense<0.000000e+00> : vector<64xf32>
    %11 = vector.multi_reduction <add>, %10, %cst_7 [1] : vector<64x32xf32> to vector<64xf32>
    %12 = vector.shape_cast %11 : vector<64xf32> to vector<64x1xf32>
    %cst_8 = arith.constant 3.200000e+01 : f32
    %13 = vector.broadcast %cst_8 : f32 to vector<64x1xf32>
    %14 = arith.divf %12, %13 : vector<64x1xf32>
    %15 = vector.broadcast %7 : vector<64x1xf32> to vector<64x32xf32>
    %16 = arith.subf %1, %15 : vector<64x32xf32>
    %cst_9 = arith.constant 9.99999974E-6 : f32
    %17 = vector.broadcast %cst_9 : f32 to vector<64x1xf32>
    %18 = arith.addf %14, %17 : vector<64x1xf32>
    %19 = math.rsqrt %18 : vector<64x1xf32>
    %20 = vector.broadcast %19 : vector<64x1xf32> to vector<64x32xf32>
    %21 = arith.mulf %16, %20 : vector<64x32xf32>
    %22 = vector.broadcast %2 : vector<1x32xf32> to vector<64x32xf32>
    %23 = arith.mulf %21, %22 : vector<64x32xf32>
    %24 = vector.broadcast %3 : vector<1x32xf32> to vector<64x32xf32>
    %25 = arith.addf %23, %24 : vector<64x32xf32>
    %c0_10 = arith.constant 0 : index
    %c0_11 = arith.constant 0 : index
    %c0_12 = arith.constant 0 : index
    %26 = vector.load %arg3[%c0_10, %c0_11, %c0_12] : memref<1x64x1xf32, #tpu.memory_space<vmem>>, vector<1x64x1xf32>
    %27 = vector.shape_cast %26 : vector<1x64x1xf32> to vector<64x1xf32>
    %c0_13 = arith.constant 0 : index
    %c0_14 = arith.constant 0 : index
    %28 = vector.load %arg6[%c0_13, %c0_14] : memref<32x160xf32, #tpu.memory_space<vmem>>, vector<32x160xf32>
    %cst_15 = arith.constant dense<0.000000e+00> : vector<64x160xf32>
    %29 = tpu.matmul %25, %28, %cst_15 {dimension_numbers = #tpu.dot_dimension_numbers<[1], [0], [0], [1], [0, 0, 1, 1], [], []>} : vector<64x32xf32>, vector<32x160xf32>, vector<64x160xf32> -> vector<64x160xf32>
    %c0_16 = arith.constant 0 : index
    %c0_17 = arith.constant 0 : index
    %30 = vector.load %arg7[%c0_16, %c0_17] : memref<1x160xf32, #tpu.memory_space<vmem>>, vector<1x160xf32>
    %31 = vector.broadcast %30 : vector<1x160xf32> to vector<64x160xf32>
    %32 = arith.addf %29, %31 : vector<64x160xf32>
    %33 = vector.extract_strided_slice %32 {offsets = [0, 0], sizes = [64, 32], strides = [1, 1]} : vector<64x160xf32> to vector<64x32xf32>
    %34 = vector.extract_strided_slice %32 {offsets = [0, 32], sizes = [64, 32], strides = [1, 1]} : vector<64x160xf32> to vector<64x32xf32>
    %35 = vector.extract_strided_slice %32 {offsets = [0, 64], sizes = [64, 32], strides = [1, 1]} : vector<64x160xf32> to vector<64x32xf32>
    %36 = vector.extract_strided_slice %32 {offsets = [0, 96], sizes = [64, 32], strides = [1, 1]} : vector<64x160xf32> to vector<64x32xf32>
    %37 = vector.extract_strided_slice %32 {offsets = [0, 128], sizes = [64, 32], strides = [1, 1]} : vector<64x160xf32> to vector<64x32xf32>
    %38 = arith.negf %34 : vector<64x32xf32>
    %39 = math.exp %38 : vector<64x32xf32>
    %cst_18 = arith.constant 1.000000e+00 : f32
    %40 = vector.broadcast %cst_18 : f32 to vector<64x32xf32>
    %41 = arith.addf %40, %39 : vector<64x32xf32>
    %42 = arith.divf %40, %41 : vector<64x32xf32>
    %43 = arith.mulf %33, %42 : vector<64x32xf32>
    %44 = vector.broadcast %27 : vector<64x1xf32> to vector<64x32xf32>
    %45 = arith.mulf %43, %44 : vector<64x32xf32>
    %46 = arith.negf %36 : vector<64x32xf32>
    %47 = math.exp %46 : vector<64x32xf32>
    %cst_19 = arith.constant 1.000000e+00 : f32
    %48 = vector.broadcast %cst_19 : f32 to vector<64x32xf32>
    %49 = arith.addf %48, %47 : vector<64x32xf32>
    %50 = arith.divf %48, %49 : vector<64x32xf32>
    %51 = arith.mulf %35, %50 : vector<64x32xf32>
    %52 = vector.broadcast %27 : vector<64x1xf32> to vector<64x32xf32>
    %53 = arith.mulf %51, %52 : vector<64x32xf32>
    %54 = tpu.transpose %45, [1, 0] : vector<64x32xf32> -> vector<32x64xf32>
    %55 = arith.truncf %54 : vector<32x64xf32> to vector<32x64xbf16>
    %c0_20 = arith.constant 0 : index
    %c0_21 = arith.constant 0 : index
    %c0_22 = arith.constant 0 : index
    %56 = vector.load %arg8[%c0_20, %c0_21, %c0_22] : memref<1x32x64xbf16, #tpu.memory_space<vmem>>, vector<1x32x64xbf16>
    %57 = vector.shape_cast %56 : vector<1x32x64xbf16> to vector<32x64xbf16>
    %58 = vector.shape_cast %55 : vector<32x64xbf16> to vector<1x32x64xbf16>
    tpu.vector_store %arg8[%c0_20, %c0_21, %c0_22], %58 {strides = array<i32>} : memref<1x32x64xbf16, #tpu.memory_space<vmem>>, vector<1x32x64xbf16>,
    %59 = tpu.transpose %53, [1, 0] : vector<64x32xf32> -> vector<32x64xf32>
    %60 = arith.truncf %59 : vector<32x64xf32> to vector<32x64xbf16>
    %c0_23 = arith.constant 0 : index
    %c0_24 = arith.constant 0 : index
    %c0_25 = arith.constant 0 : index
    %61 = vector.load %arg9[%c0_23, %c0_24, %c0_25] : memref<1x32x64xbf16, #tpu.memory_space<vmem>>, vector<1x32x64xbf16>
    %62 = vector.shape_cast %61 : vector<1x32x64xbf16> to vector<32x64xbf16>
    %63 = vector.shape_cast %60 : vector<32x64xbf16> to vector<1x32x64xbf16>
    tpu.vector_store %arg9[%c0_23, %c0_24, %c0_25], %63 {strides = array<i32>} : memref<1x32x64xbf16, #tpu.memory_space<vmem>>, vector<1x32x64xbf16>,
    %64 = arith.negf %37 : vector<64x32xf32>
    %65 = math.exp %64 : vector<64x32xf32>
    %cst_26 = arith.constant 1.000000e+00 : f32
    %66 = vector.broadcast %cst_26 : f32 to vector<64x32xf32>
    %67 = arith.addf %66, %65 : vector<64x32xf32>
    %68 = arith.divf %66, %67 : vector<64x32xf32>
    %c0_27 = arith.constant 0 : index
    %c0_28 = arith.constant 0 : index
    %c0_29 = arith.constant 0 : index
    %69 = vector.load %arg10[%c0_27, %c0_28, %c0_29] : memref<1x64x32xf32, #tpu.memory_space<vmem>>, vector<1x64x32xf32>
    %70 = vector.shape_cast %69 : vector<1x64x32xf32> to vector<64x32xf32>
    %71 = vector.shape_cast %68 : vector<64x32xf32> to vector<1x64x32xf32>
    tpu.vector_store %arg10[%c0_27, %c0_28, %c0_29], %71 {strides = array<i32>} : memref<1x64x32xf32, #tpu.memory_space<vmem>>, vector<1x64x32xf32>,
    %72 = tpu.iota {dimensions = array<i32: 1>} : vector<1x128xi32>
    %c0_i32 = arith.constant 0 : i32
    %73 = vector.broadcast %c0_i32 : i32 to vector<1x128xi32>
    %74 = arith.cmpi eq, %72, %73 : vector<1x128xi32>
    %75 = vector.shape_cast %45 : vector<64x32xf32> to vector<1x64x32xf32>
    %cst_30 = arith.constant dense<0.000000e+00> : vector<1xf32>
    %76 = vector.multi_reduction <add>, %75, %cst_30 [1, 2] : vector<1x64x32xf32> to vector<1xf32>
    %77 = vector.shape_cast %76 : vector<1xf32> to vector<1x1x1xf32>
    %78 = vector.extract %77[0, 0, 0] : f32 from vector<1x1x1xf32>
    %cst_31 = arith.constant 0.000000e+00 : f32
    %79 = vector.broadcast %78 : f32 to vector<1x128xf32>
    %80 = vector.broadcast %cst_31 : f32 to vector<1x128xf32>
    %81 = arith.select %74, %79, %80 : vector<1x128xi1>, vector<1x128xf32>
    %c1_i32 = arith.constant 1 : i32
    %82 = vector.broadcast %c1_i32 : i32 to vector<1x128xi32>
    %83 = arith.cmpi eq, %72, %82 : vector<1x128xi32>
    %84 = arith.mulf %45, %45 : vector<64x32xf32>
    %85 = vector.shape_cast %84 : vector<64x32xf32> to vector<1x64x32xf32>
    %cst_32 = arith.constant dense<0.000000e+00> : vector<1xf32>
    %86 = vector.multi_reduction <add>, %85, %cst_32 [1, 2] : vector<1x64x32xf32> to vector<1xf32>
    %87 = vector.shape_cast %86 : vector<1xf32> to vector<1x1x1xf32>
    %88 = vector.extract %87[0, 0, 0] : f32 from vector<1x1x1xf32>
    %cst_33 = arith.constant 0.000000e+00 : f32
    %89 = vector.broadcast %88 : f32 to vector<1x128xf32>
    %90 = vector.broadcast %cst_33 : f32 to vector<1x128xf32>
    %91 = arith.select %83, %89, %90 : vector<1x128xi1>, vector<1x128xf32>
    %92 = arith.addf %81, %91 : vector<1x128xf32>
    %c2_i32 = arith.constant 2 : i32
    %93 = vector.broadcast %c2_i32 : i32 to vector<1x128xi32>
    %94 = arith.cmpi eq, %72, %93 : vector<1x128xi32>
    %95 = vector.shape_cast %53 : vector<64x32xf32> to vector<1x64x32xf32>
    %cst_34 = arith.constant dense<0.000000e+00> : vector<1xf32>
    %96 = vector.multi_reduction <add>, %95, %cst_34 [1, 2] : vector<1x64x32xf32> to vector<1xf32>
    %97 = vector.shape_cast %96 : vector<1xf32> to vector<1x1x1xf32>
    %98 = vector.extract %97[0, 0, 0] : f32 from vector<1x1x1xf32>
    %cst_35 = arith.constant 0.000000e+00 : f32
    %99 = vector.broadcast %98 : f32 to vector<1x128xf32>
    %100 = vector.broadcast %cst_35 : f32 to vector<1x128xf32>
    %101 = arith.select %94, %99, %100 : vector<1x128xi1>, vector<1x128xf32>
    %102 = arith.addf %92, %101 : vector<1x128xf32>
    %c3_i32 = arith.constant 3 : i32
    %103 = vector.broadcast %c3_i32 : i32 to vector<1x128xi32>
    %104 = arith.cmpi eq, %72, %103 : vector<1x128xi32>
    %105 = arith.mulf %53, %53 : vector<64x32xf32>
    %106 = vector.shape_cast %105 : vector<64x32xf32> to vector<1x64x32xf32>
    %cst_36 = arith.constant dense<0.000000e+00> : vector<1xf32>
    %107 = vector.multi_reduction <add>, %106, %cst_36 [1, 2] : vector<1x64x32xf32> to vector<1xf32>
    %108 = vector.shape_cast %107 : vector<1xf32> to vector<1x1x1xf32>
    %109 = vector.extract %108[0, 0, 0] : f32 from vector<1x1x1xf32>
    %cst_37 = arith.constant 0.000000e+00 : f32
    %110 = vector.broadcast %109 : f32 to vector<1x128xf32>
    %111 = vector.broadcast %cst_37 : f32 to vector<1x128xf32>
    %112 = arith.select %104, %110, %111 : vector<1x128xi1>, vector<1x128xf32>
    %113 = arith.addf %102, %112 : vector<1x128xf32>
    %c0_38 = arith.constant 0 : index
    %c0_39 = arith.constant 0 : index
    %c0_40 = arith.constant 0 : index
    %c0_41 = arith.constant 0 : index
    %114 = vector.load %arg11[%c0_38, %c0_39, %c0_40, %c0_41] : memref<1x1x1x128xf32, #tpu.memory_space<vmem>>, vector<1x1x1x128xf32>
    %115 = vector.shape_cast %114 : vector<1x1x1x128xf32> to vector<1x128xf32>
    %116 = vector.shape_cast %113 : vector<1x128xf32> to vector<1x1x1x128xf32>
    tpu.vector_store %arg11[%c0_38, %c0_39, %c0_40, %c0_41], %116 {strides = array<i32>} : memref<1x1x1x128xf32, #tpu.memory_space<vmem>>, vector<1x1x1x128xf32>,
    return
  }
  func.func @transform_0(%arg0: i32, %arg1: i32) -> (i32, i32, i32) {
    %c0_i32 = arith.constant 0 : i32
    %c0_i32_0 = arith.constant 0 : i32
    return %arg0, %arg1, %c0_i32 : i32, i32, i32
  }
  func.func @transform_1(%arg0: i32, %arg1: i32) -> (i32, i32, i32) {
    %c0_i32 = arith.constant 0 : i32
    %c0_i32_0 = arith.constant 0 : i32
    return %arg0, %arg1, %c0_i32 : i32, i32, i32
  }
  func.func @transform_2(%arg0: i32, %arg1: i32) -> (i32, i32) {
    %c0_i32 = arith.constant 0 : i32
    %c0_i32_0 = arith.constant 0 : i32
    %c0_i32_1 = arith.constant 0 : i32
    return %c0_i32, %c0_i32_0 : i32, i32
  }
  func.func @transform_3(%arg0: i32, %arg1: i32) -> (i32, i32) {
    %c0_i32 = arith.constant 0 : i32
    %c0_i32_0 = arith.constant 0 : i32
    %c0_i32_1 = arith.constant 0 : i32
    return %c0_i32, %c0_i32_0 : i32, i32
  }
  func.func @transform_4(%arg0: i32, %arg1: i32) -> (i32, i32) {
    %c0_i32 = arith.constant 0 : i32
    %c0_i32_0 = arith.constant 0 : i32
    %c0_i32_1 = arith.constant 0 : i32
    return %c0_i32, %c0_i32_0 : i32, i32
  }
  func.func @transform_5(%arg0: i32, %arg1: i32) -> (i32, i32) {
    %c0_i32 = arith.constant 0 : i32
    %c0_i32_0 = arith.constant 0 : i32
    %c0_i32_1 = arith.constant 0 : i32
    return %c0_i32, %c0_i32_0 : i32, i32
  }
  func.func @transform_6(%arg0: i32, %arg1: i32) -> (i32, i32, i32) {
    %c0_i32 = arith.constant 0 : i32
    %c0_i32_0 = arith.constant 0 : i32
    return %arg0, %c0_i32, %arg1 : i32, i32, i32
  }
  func.func @transform_7(%arg0: i32, %arg1: i32) -> (i32, i32, i32) {
    %c0_i32 = arith.constant 0 : i32
    %c0_i32_0 = arith.constant 0 : i32
    return %arg0, %c0_i32, %arg1 : i32, i32, i32
  }
  func.func @transform_8(%arg0: i32, %arg1: i32) -> (i32, i32, i32) {
    %c0_i32 = arith.constant 0 : i32
    %c0_i32_0 = arith.constant 0 : i32
    return %arg0, %arg1, %c0_i32 : i32, i32, i32
  }
  func.func @transform_9(%arg0: i32, %arg1: i32) -> (i32, i32, i32, i32) {
    %c0_i32 = arith.constant 0 : i32
    %c0_i32_0 = arith.constant 0 : i32
    %c0_i32_1 = arith.constant 0 : i32
    return %arg0, %arg1, %c0_i32, %c0_i32_0 : i32, i32, i32, i32
  }
}

</mosaic_0001>

<llo_original>
// kernel: tpu_custom_call.1
$region0: #{tpu_custom_call.1}
  #allocation0 [shape = 'u32[]', space=smem, size = 0x4, offset = 0x4, fixed_abs, tag = 'smem constant byte address 0x4 - core index']
  #allocation1 [shape = 'u32[72,128]{1,0:T(1,128)}', space=vmem, size = 0x9000, scoped, tag = 'internal scratch']
  %s0 = inlined_call_operand.vmem [shape: f32[2,64,32], index: 0, kind: input, shape index: {}]
  %s1 = inlined_call_operand.vmem [shape: f32[2,64,1], index: 1, kind: input, shape index: {}]
  %s2 = inlined_call_operand.vmem [shape: f32[1,32], index: 2, kind: input, shape index: {}]
  %s3 = inlined_call_operand.vmem [shape: f32[1,32], index: 3, kind: input, shape index: {}]
  %s4 = inlined_call_operand.vmem [shape: f32[32,160], index: 4, kind: input, shape index: {}]
  %s5 = inlined_call_operand.vmem [shape: f32[1,160], index: 5, kind: input, shape index: {}]
  %s6 = inlined_call_operand.hbm [shape: bf16[2,32,64], index: 6, kind: output, shape index: {0}]
  %s7 = inlined_call_operand.hbm [shape: bf16[2,32,64], index: 7, kind: output, shape index: {1}]
  %s8 = inlined_call_operand.vmem [shape: f32[2,64,32], index: 8, kind: output, shape index: {2}]
  %s9 = inlined_call_operand.hbm [shape: f32[2,1,1,128], index: 9, kind: output, shape index: {3}]
  %10 = xla_tuple %s6, %s7, %s8, %s9
  %s11 = sld [smem:[#allocation0]]
  $region81: #{tpu_custom_call.1} parent=0
    _
  %s13 = ssub.s32 1, %s11
  %s14 = scalar_select 0, %s13, %s11
  $region1: #{tpu_custom_call.1} parent=0
    #allocation2 [shape = 'u8[16384]{0}', space=vmem, size = 0x4000, scoped, tag = 'output window, operand 0']
    #allocation3 [shape = 's32[2]{0}', space=sflag, size = 0x8, scoped, tag = 'scoped memory for tpu_custom_call.1']
    #allocation4 [shape = 'u8[16384]{0}', space=vmem, size = 0x4000, scoped, tag = 'output window, operand 1']
    #allocation5 [shape = 's32[2]{0}', space=sflag, size = 0x8, scoped, tag = 'scoped memory for tpu_custom_call.1']
    #allocation6 [shape = 'u8[1024]{0}', space=vmem, size = 0x400, scoped, tag = 'output window, operand 3']
    %15 = vsyncpa [#allocation3], 0
    %s16 = scalar_lea.sflag [#allocation3], 1
    %17 = vsyncpa %s16, 0
    %18 = vsyncpa [#allocation5], 0
    %s19 = scalar_lea.sflag [#allocation5], 1
    %20 = vsyncpa %s19, 0
    loop: start=0, step=1, limit=4
    $region2: #{tpu_custom_call.1} parent=1 // loop_pre_header
      _
    $region3: #{tpu_custom_call.1} parent=1 // loop_header
      %s22 = sphi 0, %s26
      %p23 = scmp.ge.s32.totalorder %s22, 4
      %s29 = sphi 0, %s41
      %s30 = sphi 0, %s37
      %s31 = sphi 0, %s29
      %s32 = sphi 0, %s30
      %s33 = sphi 0, %s31
      %s34 = sphi 0, %s32
      %s46 = sphi 0, %s48
      %s49 = sphi 0, %s46
      %s50 = sphi 0, %s49
      %s66 = sphi 0, %s50
      %s74 = sphi 0, %s76
      %s77 = sphi 0, %s74
      %s78 = sphi 0, %s77
      %s94 = sphi 0, %s78
      %s98 = sphi 0, %s98
      %s100 = sphi 0, %s98
      %s101 = sphi 0, %s100
      %s115 = sphi 0, %s101
      %s119 = sphi 0, %s119
      %s121 = sphi 0, %s119
      %s122 = sphi 0, %s121
      %s136 = sphi 0, %s122
      %s140 = sphi 0, %s140
      %s142 = sphi 0, %s140
      %s143 = sphi 0, %s142
      %s157 = sphi 0, %s143
      %s161 = sphi 0, %s161
      %s163 = sphi 0, %s161
      %s164 = sphi 0, %s163
      %s178 = sphi 0, %s164
      %s186 = sphi 0, %s188
      %s189 = sphi 0, %s186
      %s190 = sphi 0, %s189
      %s206 = sphi 0, %s190
      %s214 = sphi 0, %s216
      %s217 = sphi 0, %s214
      %s218 = sphi 0, %s217
      %s234 = sphi 0, %s218
      %s242 = sphi 0, %s244
      %s245 = sphi 0, %s242
      %s246 = sphi 0, %s245
      %s262 = sphi 0, %s246
      %s270 = sphi 0, %s272
      %s273 = sphi 0, %s270
      %s274 = sphi 0, %s273
      %s290 = sphi 0, %s274
    $region4: #{tpu_custom_call.1} parent=1 // loop_header_branch
      %25 = sbr.rel (%p23) target = $region8
    $region5: #{tpu_custom_call.1} parent=1 // loop_body
      %s27 = ssub.s32 %s22, 1
      %s28 = ssub.s32 %s22, 2
      %s35 = sadd.s32 1, %s30
      %p36 = scmp.ge.s32.totalorder %s35, 1
      %s37 = scalar_select %p36, 0, %s35
      %s38 = sadd.s32 1, %s29
      %s39 = scalar_select %p36, %s38, %s29
      %p40 = scmp.ge.s32.totalorder %s39, 2
      %s41 = scalar_select %p40, 0, %s39
      %s42 = ssub.s32 %s29, %s41
      %s43 = ssub.s32 %s30, %s37
      %s44 = sor.u32 %s42, %s43
      %p45 = scmp.eq.s32.totalorder %s44, 0
      %s47 = sadd.s32 %s46, 1
      %s48 = scalar_select %p45, %s46, %s47
      %p51 = pneg %p45
      %p52 = scmp.eq.s32.totalorder %s22, 1
      %p53 = por %p51, %p52
      %p54 = scmp.ne.s32.totalorder %s46, %s49
      %p55 = scmp.eq.s32.totalorder %s22, 0
      %p56 = por %p54, %p55
      %p57 = scmp.ne.s32.totalorder %s46, %s49
      %p58 = scmp.eq.s32.totalorder %s27, 1
      %p59 = por %p57, %p58
      %p60 = scmp.ne.s32.totalorder %s49, %s50
      %p61 = scmp.eq.s32.totalorder %s27, 0
      %p62 = por %p60, %p61
      %p63 = scmp.ne.s32.totalorder %s49, %s50
      %p64 = scmp.eq.s32.totalorder %s28, 1
      %p65 = por %p63, %p64
      %p67 = scmp.ne.s32.totalorder %s50, %s66
      %p68 = scmp.eq.s32.totalorder %s28, 0
      %p69 = por %p67, %p68
      %s70 = ssub.s32 %s29, %s41
      %s71 = ssub.s32 %s30, %s37
      %s72 = sor.u32 %s70, %s71
      %p73 = scmp.eq.s32.totalorder %s72, 0
      %s75 = sadd.s32 %s74, 1
      %s76 = scalar_select %p73, %s74, %s75
      %p79 = pneg %p73
      %p80 = scmp.eq.s32.totalorder %s22, 1
      %p81 = por %p79, %p80
      %p82 = scmp.ne.s32.totalorder %s74, %s77
      %p83 = scmp.eq.s32.totalorder %s22, 0
      %p84 = por %p82, %p83
      %p85 = scmp.ne.s32.totalorder %s74, %s77
      %p86 = scmp.eq.s32.totalorder %s27, 1
      %p87 = por %p85, %p86
      %p88 = scmp.ne.s32.totalorder %s77, %s78
      %p89 = scmp.eq.s32.totalorder %s27, 0
      %p90 = por %p88, %p89
      %p91 = scmp.ne.s32.totalorder %s77, %s78
      %p92 = scmp.eq.s32.totalorder %s28, 1
      %p93 = por %p91, %p92
      %p95 = scmp.ne.s32.totalorder %s78, %s94
      %p96 = scmp.eq.s32.totalorder %s28, 0
      %p97 = por %p95, %p96
      %s99 = sadd.s32 %s98, 1
      %p102 = scmp.eq.s32.totalorder %s22, 1
      %p103 = scmp.ne.s32.totalorder %s98, %s100
      %p104 = scmp.eq.s32.totalorder %s22, 0
      %p105 = por %p103, %p104
      %p106 = scmp.ne.s32.totalorder %s98, %s100
      %p107 = scmp.eq.s32.totalorder %s27, 1
      %p108 = por %p106, %p107
      %p109 = scmp.ne.s32.totalorder %s100, %s101
      %p110 = scmp.eq.s32.totalorder %s27, 0
      %p111 = por %p109, %p110
      %p112 = scmp.ne.s32.totalorder %s100, %s101
      %p113 = scmp.eq.s32.totalorder %s28, 1
      %p114 = por %p112, %p113
      %p116 = scmp.ne.s32.totalorder %s101, %s115
      %p117 = scmp.eq.s32.totalorder %s28, 0
      %p118 = por %p116, %p117
      %s120 = sadd.s32 %s119, 1
      %p123 = scmp.eq.s32.totalorder %s22, 1
      %p124 = scmp.ne.s32.totalorder %s119, %s121
      %p125 = scmp.eq.s32.totalorder %s22, 0
      %p126 = por %p124, %p125
      %p127 = scmp.ne.s32.totalorder %s119, %s121
      %p128 = scmp.eq.s32.totalorder %s27, 1
      %p129 = por %p127, %p128
      %p130 = scmp.ne.s32.totalorder %s121, %s122
      %p131 = scmp.eq.s32.totalorder %s27, 0
      %p132 = por %p130, %p131
      %p133 = scmp.ne.s32.totalorder %s121, %s122
      %p134 = scmp.eq.s32.totalorder %s28, 1
      %p135 = por %p133, %p134
      %p137 = scmp.ne.s32.totalorder %s122, %s136
      %p138 = scmp.eq.s32.totalorder %s28, 0
      %p139 = por %p137, %p138
      %s141 = sadd.s32 %s140, 1
      %p144 = scmp.eq.s32.totalorder %s22, 1
      %p145 = scmp.ne.s32.totalorder %s140, %s142
      %p146 = scmp.eq.s32.totalorder %s22, 0
      %p147 = por %p145, %p146
      %p148 = scmp.ne.s32.totalorder %s140, %s142
      %p149 = scmp.eq.s32.totalorder %s27, 1
      %p150 = por %p148, %p149
      %p151 = scmp.ne.s32.totalorder %s142, %s143
      %p152 = scmp.eq.s32.totalorder %s27, 0
      %p153 = por %p151, %p152
      %p154 = scmp.ne.s32.totalorder %s142, %s143
      %p155 = scmp.eq.s32.totalorder %s28, 1
      %p156 = por %p154, %p155
      %p158 = scmp.ne.s32.totalorder %s143, %s157
      %p159 = scmp.eq.s32.totalorder %s28, 0
      %p160 = por %p158, %p159
      %s162 = sadd.s32 %s161, 1
      %p165 = scmp.eq.s32.totalorder %s22, 1
      %p166 = scmp.ne.s32.totalorder %s161, %s163
      %p167 = scmp.eq.s32.totalorder %s22, 0
      %p168 = por %p166, %p167
      %p169 = scmp.ne.s32.totalorder %s161, %s163
      %p170 = scmp.eq.s32.totalorder %s27, 1
      %p171 = por %p169, %p170
      %p172 = scmp.ne.s32.totalorder %s163, %s164
      %p173 = scmp.eq.s32.totalorder %s27, 0
      %p174 = por %p172, %p173
      %p175 = scmp.ne.s32.totalorder %s163, %s164
      %p176 = scmp.eq.s32.totalorder %s28, 1
      %p177 = por %p175, %p176
      %p179 = scmp.ne.s32.totalorder %s164, %s178
      %p180 = scmp.eq.s32.totalorder %s28, 0
      %p181 = por %p179, %p180
      %s182 = ssub.s32 %s29, %s41
      %s183 = ssub.s32 %s30, %s37
      %s184 = sor.u32 %s182, %s183
      %p185 = scmp.eq.s32.totalorder %s184, 0
      %s187 = sadd.s32 %s186, 1
      %s188 = scalar_select %p185, %s186, %s187
      %p191 = pneg %p185
      %p192 = scmp.eq.s32.totalorder %s22, 1
      %p193 = por %p191, %p192
      %p194 = scmp.ne.s32.totalorder %s186, %s189
      %p195 = scmp.eq.s32.totalorder %s22, 0
      %p196 = por %p194, %p195
      %p197 = scmp.ne.s32.totalorder %s186, %s189
      %p198 = scmp.eq.s32.totalorder %s27, 1
      %p199 = por %p197, %p198
      %p200 = scmp.ne.s32.totalorder %s189, %s190
      %p201 = scmp.eq.s32.totalorder %s27, 0
      %p202 = por %p200, %p201
      %p203 = scmp.ne.s32.totalorder %s189, %s190
      %p204 = scmp.eq.s32.totalorder %s28, 1
      %p205 = por %p203, %p204
      %p207 = scmp.ne.s32.totalorder %s190, %s206
      %p208 = scmp.eq.s32.totalorder %s28, 0
      %p209 = por %p207, %p208
      %s210 = ssub.s32 %s29, %s41
      %s211 = ssub.s32 %s30, %s37
      %s212 = sor.u32 %s210, %s211
      %p213 = scmp.eq.s32.totalorder %s212, 0
      %s215 = sadd.s32 %s214, 1
      %s216 = scalar_select %p213, %s214, %s215
      %p219 = pneg %p213
      %p220 = scmp.eq.s32.totalorder %s22, 1
      %p221 = por %p219, %p220
      %p222 = scmp.ne.s32.totalorder %s214, %s217
      %p223 = scmp.eq.s32.totalorder %s22, 0
      %p224 = por %p222, %p223
      %p225 = scmp.ne.s32.totalorder %s214, %s217
      %p226 = scmp.eq.s32.totalorder %s27, 1
      %p227 = por %p225, %p226
      %p228 = scmp.ne.s32.totalorder %s217, %s218
      %p229 = scmp.eq.s32.totalorder %s27, 0
      %p230 = por %p228, %p229
      %p231 = scmp.ne.s32.totalorder %s217, %s218
      %p232 = scmp.eq.s32.totalorder %s28, 1
      %p233 = por %p231, %p232
      %p235 = scmp.ne.s32.totalorder %s218, %s234
      %p236 = scmp.eq.s32.totalorder %s28, 0
      %p237 = por %p235, %p236
      %s238 = ssub.s32 %s29, %s41
      %s239 = ssub.s32 %s30, %s37
      %s240 = sor.u32 %s238, %s239
      %p241 = scmp.eq.s32.totalorder %s240, 0
      %s243 = sadd.s32 %s242, 1
      %s244 = scalar_select %p241, %s242, %s243
      %p247 = pneg %p241
      %p248 = scmp.eq.s32.totalorder %s22, 1
      %p249 = por %p247, %p248
      %p250 = scmp.ne.s32.totalorder %s242, %s245
      %p251 = scmp.eq.s32.totalorder %s22, 0
      %p252 = por %p250, %p251
      %p253 = scmp.ne.s32.totalorder %s242, %s245
      %p254 = scmp.eq.s32.totalorder %s27, 1
      %p255 = por %p253, %p254
      %p256 = scmp.ne.s32.totalorder %s245, %s246
      %p257 = scmp.eq.s32.totalorder %s27, 0
      %p258 = por %p256, %p257
      %p259 = scmp.ne.s32.totalorder %s245, %s246
      %p260 = scmp.eq.s32.totalorder %s28, 1
      %p261 = por %p259, %p260
      %p263 = scmp.ne.s32.totalorder %s246, %s262
      %p264 = scmp.eq.s32.totalorder %s28, 0
      %p265 = por %p263, %p264
      %s266 = ssub.s32 %s29, %s41
      %s267 = ssub.s32 %s30, %s37
      %s268 = sor.u32 %s266, %s267
      %p269 = scmp.eq.s32.totalorder %s268, 0
      %s271 = sadd.s32 %s270, 1
      %s272 = scalar_select %p269, %s270, %s271
      %p275 = pneg %p269
      %p276 = scmp.eq.s32.totalorder %s22, 1
      %p277 = por %p275, %p276
      %p278 = scmp.ne.s32.totalorder %s270, %s273
      %p279 = scmp.eq.s32.totalorder %s22, 0
      %p280 = por %p278, %p279
      %p281 = scmp.ne.s32.totalorder %s270, %s273
      %p282 = scmp.eq.s32.totalorder %s27, 1
      %p283 = por %p281, %p282
      %p284 = scmp.ne.s32.totalorder %s273, %s274
      %p285 = scmp.eq.s32.totalorder %s27, 0
      %p286 = por %p284, %p285
      %p287 = scmp.ne.s32.totalorder %s273, %s274
      %p288 = scmp.eq.s32.totalorder %s28, 1
      %p289 = por %p287, %p288
      %p291 = scmp.ne.s32.totalorder %s274, %s290
      %p292 = scmp.eq.s32.totalorder %s28, 0
      %p293 = por %p291, %p292
      %p294 = scmp.le.s32.totalorder 1, %s22
      %p295 = scmp.lt.s32.totalorder %s22, 3
      %p296 = pnand %p294, %p295
      %p297 = pneg %p296
      // Predicated region
      $region9: #{tpu_custom_call.1} parent=5 // pred_check
        _
      $region10: #{tpu_custom_call.1} parent=5 // pred_check_branch
        %299 = sbr.rel (%p296) target = $region12
      $region11: #{tpu_custom_call.1} parent=5 // pred_region
        %s300 = ssub.s32 %s22, 1
        // Predicated region
        $region13: #{tpu_custom_call.1} parent=11 // pred_check
          %p301 = pneg %p111
        $region14: #{tpu_custom_call.1} parent=11 // pred_check_branch
          %303 = sbr.rel (%p301) target = $region16
        $region15: #{tpu_custom_call.1} parent=11 // pred_region
          _
        $region16: #{tpu_custom_call.1} parent=11 // pred_fallthru
          _
        // Predicated region
        $region17: #{tpu_custom_call.1} parent=11 // pred_check
          %p304 = pneg %p132
        $region18: #{tpu_custom_call.1} parent=11 // pred_check_branch
          %306 = sbr.rel (%p304) target = $region20
        $region19: #{tpu_custom_call.1} parent=11 // pred_region
          _
        $region20: #{tpu_custom_call.1} parent=11 // pred_fallthru
          _
        // Predicated region
        $region21: #{tpu_custom_call.1} parent=11 // pred_check
          %p307 = pneg %p153
        $region22: #{tpu_custom_call.1} parent=11 // pred_check_branch
          %309 = sbr.rel (%p307) target = $region24
        $region23: #{tpu_custom_call.1} parent=11 // pred_region
          _
        $region24: #{tpu_custom_call.1} parent=11 // pred_fallthru
          _
        // Predicated region
        $region25: #{tpu_custom_call.1} parent=11 // pred_check
          %p310 = pneg %p174
        $region26: #{tpu_custom_call.1} parent=11 // pred_check_branch
          %312 = sbr.rel (%p310) target = $region28
        $region27: #{tpu_custom_call.1} parent=11 // pred_region
          _
        $region28: #{tpu_custom_call.1} parent=11 // pred_fallthru
          _
      $region12: #{tpu_custom_call.1} parent=5 // pred_fallthru
        _
      %p313 = scmp.lt.s32.totalorder %s22, 2
      // Predicated region
      $region29: #{tpu_custom_call.1} parent=5 // pred_check
        %p314 = pneg %p313
      $region30: #{tpu_custom_call.1} parent=5 // pred_check_branch
        %316 = sbr.rel (%p314) target = $region32
      $region31: #{tpu_custom_call.1} parent=5 // pred_region
        // Predicated region
        $region33: #{tpu_custom_call.1} parent=31 // pred_check
          %p317 = pneg %p56
        $region34: #{tpu_custom_call.1} parent=31 // pred_check_branch
          %319 = sbr.rel (%p317) target = $region36
        $region35: #{tpu_custom_call.1} parent=31 // pred_region
          %s320 = smul.u32 8, %s30
          %p321 = scmp.lt.s32.totalorder %s29, 1
          %s322 = scalar_select %p321, %s29, 1
          %p323 = scmp.lt.s32.totalorder %s320, 7
          %s324 = scalar_select %p323, %s320, 7
          %s325 = smul.addr %s322, 8
          %s326 = sadd.s32 %s324, %s325
          %s327 = smul.addr %s326, 8
          %s328 = scalar_lea.vmem %s0, %s327
          %s329 = smul.u32 8, %s30
        $region36: #{tpu_custom_call.1} parent=31 // pred_fallthru
          _
        // Predicated region
        $region37: #{tpu_custom_call.1} parent=31 // pred_check
          %p330 = pneg %p84
        $region38: #{tpu_custom_call.1} parent=31 // pred_check_branch
          %332 = sbr.rel (%p330) target = $region40
        $region39: #{tpu_custom_call.1} parent=31 // pred_region
          %s333 = smul.u32 8, %s30
          %p334 = scmp.lt.s32.totalorder %s29, 1
          %s335 = scalar_select %p334, %s29, 1
          %p336 = scmp.lt.s32.totalorder %s333, 7
          %s337 = scalar_select %p336, %s333, 7
          %s338 = smul.addr %s335, 8
          %s339 = sadd.s32 %s337, %s338
          %s340 = smul.addr %s339, 8
          %s341 = scalar_lea.vmem %s1, %s340
          %s342 = smul.u32 8, %s30
        $region40: #{tpu_custom_call.1} parent=31 // pred_fallthru
          _
      $region32: #{tpu_custom_call.1} parent=5 // pred_fallthru
        _
      %p343 = scmp.le.s32.totalorder 1, %s22
      %p344 = scmp.lt.s32.totalorder %s22, 3
      %p345 = pnand %p343, %p344
      %p346 = pneg %p345
      // Predicated region
      $region41: #{tpu_custom_call.1} parent=5 // pred_check
        _
      $region42: #{tpu_custom_call.1} parent=5 // pred_check_branch
        %348 = sbr.rel (%p345) target = $region44
      $region43: #{tpu_custom_call.1} parent=5 // pred_region
        %s349 = ssub.s32 %s22, 1
        %s350 = smul.u32 8, %s32
        %p351 = scmp.lt.s32.totalorder %s31, 1
        %s352 = scalar_select %p351, %s31, 1
        %p353 = scmp.lt.s32.totalorder %s350, 7
        %s354 = scalar_select %p353, %s350, 7
        %s355 = smul.addr %s352, 8
        %s356 = sadd.s32 %s354, %s355
        %s357 = smul.addr %s356, 8
        %s358 = scalar_lea.vmem %s0, %s357
        %p359 = pneg %p62
        %p360 = pneg %p59
        %s361 = smul.u32 8, %s32
        %p362 = scmp.lt.s32.totalorder %s31, 1
        %s363 = scalar_select %p362, %s31, 1
        %p364 = scmp.lt.s32.totalorder %s361, 7
        %s365 = scalar_select %p364, %s361, 7
        %s366 = smul.addr %s363, 8
        %s367 = sadd.s32 %s365, %s366
        %s368 = smul.addr %s367, 8
        %s369 = scalar_lea.vmem %s1, %s368
        %p370 = pneg %p90
        %p371 = pneg %p87
        %p372 = pneg %p111
        %p373 = pneg %p108
        %p374 = pneg %p132
        %p375 = pneg %p129
        %p376 = pneg %p153
        %p377 = pneg %p150
        %p378 = pneg %p174
        %p379 = pneg %p171
        %p380 = pneg %p202
        %p381 = pneg %p199
        %s382 = sand.u32 %s189, 1
        %s383 = scalar_lea.sflag [#allocation3], %s382
        %s384 = sand.u32 %s189, 1
        %s385 = smul.addr %s384, 16
        %s386 = scalar_lea.vmem [#allocation2], %s385
        %p387 = pneg %p230
        %p388 = pneg %p227
        %s389 = sand.u32 %s27, 1
        %s390 = scalar_lea.sflag [#allocation5], %s389
        %s391 = sand.u32 %s217, 1
        %s392 = smul.addr %s391, 16
        %s393 = scalar_lea.vmem [#allocation4], %s392
        %p394 = pneg %p258
        %p395 = pneg %p255
        %s396 = smul.u32 8, %s32
        %p397 = scmp.lt.s32.totalorder %s31, 1
        %s398 = scalar_select %p397, %s31, 1
        %p399 = scmp.lt.s32.totalorder %s396, 7
        %s400 = scalar_select %p399, %s396, 7
        %s401 = smul.addr %s398, 8
        %s402 = sadd.s32 %s400, %s401
        %s403 = smul.addr %s402, 8
        %s404 = scalar_lea.vmem %s8, %s403
        %p405 = pneg %p286
        %p406 = pneg %p283
        %s407 = sand.u32 %s27, 1
        %s408 = scalar_lea.sflag [#allocation5], %s407
        %s409 = sand.u32 %s273, 1
        %s410 = scalar_lea.vmem [#allocation6], %s409
        %s411 = smul.u32 8, %s32
        %p412 = scmp.lt.s32.totalorder %s31, 1
        %s413 = scalar_select %p412, %s31, 1
        %p414 = scmp.lt.s32.totalorder %s411, 7
        %s415 = scalar_select %p414, %s411, 7
        %s416 = smul.addr %s413, 8
        %s417 = sadd.s32 %s415, %s416
        %s418 = smul.addr %s417, 8
        %s419 = scalar_lea.vmem %s0, %s418
        %s420 = smul.u32 8, %s32
        %s421 = smul.u32 8, %s32
        %p422 = scmp.lt.s32.totalorder %s31, 1
        %s423 = scalar_select %p422, %s31, 1
        %p424 = scmp.lt.s32.totalorder %s421, 7
        %s425 = scalar_select %p424, %s421, 7
        %s426 = smul.addr %s423, 8
        %s427 = sadd.s32 %s425, %s426
        %s428 = smul.addr %s427, 8
        %s429 = scalar_lea.vmem %s1, %s428
        %s430 = smul.u32 8, %s32
        %s431 = smul.u32 8, %s32
        %p432 = scmp.lt.s32.totalorder %s31, 1
        %s433 = scalar_select %p432, %s31, 1
        %p434 = scmp.lt.s32.totalorder %s431, 7
        %s435 = scalar_select %p434, %s431, 7
        %s436 = smul.addr %s433, 8
        %s437 = sadd.s32 %s435, %s436
        %s438 = smul.addr %s437, 8
        %s439 = scalar_lea.vmem %s8, %s438
        %s440 = smul.u32 8, %s32
        %v441 = vld [vmem:[%s419] sm:$0xff]
        %v442 = vld [vmem:[%s419 + $0x8] sm:$0xff]
        %v443 = vld [vmem:[%s419 + $0x10] sm:$0xff]
        %v444 = vld [vmem:[%s419 + $0x18] sm:$0xff]
        %v445 = vld [vmem:[%s419 + $0x20] sm:$0xff]
        %v446 = vld [vmem:[%s419 + $0x28] sm:$0xff]
        %v447 = vld [vmem:[%s419 + $0x30] sm:$0xff]
        %v448 = vld [vmem:[%s419 + $0x38] sm:$0xff]
        %v449 = vld [vmem:[%s2] sm:$0x1]
        %v450 = vld [vmem:[%s3] sm:$0x1]
        %vm451 = vcmask 261120
        %v452 = vsel %vm451, %v441, 0.0
        %453 = vadd.xlane.f32.xlu0 %v452
        %v454 = vpop.xlane.xlu0 %453
        %v455 = vsel %vm451, %v442, 0.0
        %456 = vadd.xlane.f32.xlu0 %v455
        %v457 = vpop.xlane.xlu0 %456
        %v458 = vsel %vm451, %v443, 0.0
        %459 = vadd.xlane.f32.xlu0 %v458
        %v460 = vpop.xlane.xlu0 %459
        %v461 = vsel %vm451, %v444, 0.0
        %462 = vadd.xlane.f32.xlu0 %v461
        %v463 = vpop.xlane.xlu0 %462
        %v464 = vsel %vm451, %v445, 0.0
        %465 = vadd.xlane.f32.xlu0 %v464
        %v466 = vpop.xlane.xlu0 %465
        %v467 = vsel %vm451, %v446, 0.0
        %468 = vadd.xlane.f32.xlu0 %v467
        %v469 = vpop.xlane.xlu0 %468
        %v470 = vsel %vm451, %v447, 0.0
        %471 = vadd.xlane.f32.xlu0 %v470
        %v472 = vpop.xlane.xlu0 %471
        %v473 = vsel %vm451, %v448, 0.0
        %474 = vadd.xlane.f32.xlu0 %v473
        %v475 = vpop.xlane.xlu0 %474
        %v476 = vrcp.pop 32.0
        %v477 = vmul.f32 32.0, %v476
        %v478 = vsub.f32 1.0, %v477
        %v479 = vmul.f32 %v476, %v478
        %v480 = vadd.f32 %v476, %v479
        %vm481 = vweird.f32 %v476
        %v482 = vsel %vm481, %v476, %v480
        %v483 = vmul.f32 %v454, %v482
        %v484 = vmul.f32 %v457, %v482
        %v485 = vmul.f32 %v460, %v482
        %v486 = vmul.f32 %v463, %v482
        %v487 = vmul.f32 %v466, %v482
        %v488 = vmul.f32 %v469, %v482
        %v489 = vmul.f32 %v472, %v482
        %v490 = vmul.f32 %v475, %v482
        %v491 = vsub.f32 %v441, %v483
        %v492 = vsub.f32 %v442, %v484
        %v493 = vsub.f32 %v443, %v485
        %v494 = vsub.f32 %v444, %v486
        %v495 = vsub.f32 %v445, %v487
        %v496 = vsub.f32 %v446, %v488
        %v497 = vsub.f32 %v447, %v489
        %v498 = vsub.f32 %v448, %v490
        %v499 = vmul.f32 %v491, %v491
        %v500 = vmul.f32 %v492, %v492
        %v501 = vmul.f32 %v493, %v493
        %v502 = vmul.f32 %v494, %v494
        %v503 = vmul.f32 %v495, %v495
        %v504 = vmul.f32 %v496, %v496
        %v505 = vmul.f32 %v497, %v497
        %v506 = vmul.f32 %v498, %v498
        %v507 = vsel %vm451, %v499, 0.0
        %508 = vadd.xlane.f32.xlu0 %v507
        %v509 = vpop.xlane.xlu0 %508
        %v510 = vsel %vm451, %v500, 0.0
        %511 = vadd.xlane.f32.xlu0 %v510
        %v512 = vpop.xlane.xlu0 %511
        %v513 = vsel %vm451, %v501, 0.0
        %514 = vadd.xlane.f32.xlu0 %v513
        %v515 = vpop.xlane.xlu0 %514
        %v516 = vsel %vm451, %v502, 0.0
        %517 = vadd.xlane.f32.xlu0 %v516
        %v518 = vpop.xlane.xlu0 %517
        %v519 = vsel %vm451, %v503, 0.0
        %520 = vadd.xlane.f32.xlu0 %v519
        %v521 = vpop.xlane.xlu0 %520
        %v522 = vsel %vm451, %v504, 0.0
        %523 = vadd.xlane.f32.xlu0 %v522
        %v524 = vpop.xlane.xlu0 %523
        %v525 = vsel %vm451, %v505, 0.0
        %526 = vadd.xlane.f32.xlu0 %v525
        %v527 = vpop.xlane.xlu0 %526
        %v528 = vsel %vm451, %v506, 0.0
        %529 = vadd.xlane.f32.xlu0 %v528
        %v530 = vpop.xlane.xlu0 %529
        %v531 = vmul.f32 %v509, %v482
        %v532 = vmul.f32 %v512, %v482
        %v533 = vmul.f32 %v515, %v482
        %v534 = vmul.f32 %v518, %v482
        %v535 = vmul.f32 %v521, %v482
        %v536 = vmul.f32 %v524, %v482
        %v537 = vmul.f32 %v527, %v482
        %v538 = vmul.f32 %v530, %v482
        %v539 = vadd.f32 %v531, 1e-05
        %v540 = vadd.f32 %v532, 1e-05
        %v541 = vadd.f32 %v533, 1e-05
        %v542 = vadd.f32 %v534, 1e-05
        %v543 = vadd.f32 %v535, 1e-05
        %v544 = vadd.f32 %v536, 1e-05
        %v545 = vadd.f32 %v537, 1e-05
        %v546 = vadd.f32 %v538, 1e-05
        %v547 = vrsqrt.pop %v539
        %v548 = vmul.f32 %v547, %v539
        %v549 = vmul.f32 %v548, %v547
        %v550 = vmul.f32 0.5, %v549
        %v551 = vsub.f32 1.5, %v550
        %v552 = vmul.f32 %v547, %v551
        %vm553 = vweird.f32 %v539
        %vm554 = vweird.f32 %v547
        %vm555 = vmor %vm553, %vm554
        %v556 = vsel %vm555, %v547, %v552
        %v557 = vrsqrt.pop %v540
        %v558 = vmul.f32 %v557, %v540
        %v559 = vmul.f32 %v558, %v557
        %v560 = vmul.f32 0.5, %v559
        %v561 = vsub.f32 1.5, %v560
        %v562 = vmul.f32 %v557, %v561
        %vm563 = vweird.f32 %v540
        %vm564 = vweird.f32 %v557
        %vm565 = vmor %vm563, %vm564
        %v566 = vsel %vm565, %v557, %v562
        %v567 = vrsqrt.pop %v541
        %v568 = vmul.f32 %v567, %v541
        %v569 = vmul.f32 %v568, %v567
        %v570 = vmul.f32 0.5, %v569
        %v571 = vsub.f32 1.5, %v570
        %v572 = vmul.f32 %v567, %v571
        %vm573 = vweird.f32 %v541
        %vm574 = vweird.f32 %v567
        %vm575 = vmor %vm573, %vm574
        %v576 = vsel %vm575, %v567, %v572
        %v577 = vrsqrt.pop %v542
        %v578 = vmul.f32 %v577, %v542
        %v579 = vmul.f32 %v578, %v577
        %v580 = vmul.f32 0.5, %v579
        %v581 = vsub.f32 1.5, %v580
        %v582 = vmul.f32 %v577, %v581
        %vm583 = vweird.f32 %v542
        %vm584 = vweird.f32 %v577
        %vm585 = vmor %vm583, %vm584
        %v586 = vsel %vm585, %v577, %v582
        %v587 = vrsqrt.pop %v543
        %v588 = vmul.f32 %v587, %v543
        %v589 = vmul.f32 %v588, %v587
        %v590 = vmul.f32 0.5, %v589
        %v591 = vsub.f32 1.5, %v590
        %v592 = vmul.f32 %v587, %v591
        %vm593 = vweird.f32 %v543
        %vm594 = vweird.f32 %v587
        %vm595 = vmor %vm593, %vm594
        %v596 = vsel %vm595, %v587, %v592
        %v597 = vrsqrt.pop %v544
        %v598 = vmul.f32 %v597, %v544
        %v599 = vmul.f32 %v598, %v597
        %v600 = vmul.f32 0.5, %v599
        %v601 = vsub.f32 1.5, %v600
        %v602 = vmul.f32 %v597, %v601
        %vm603 = vweird.f32 %v544
        %vm604 = vweird.f32 %v597
        %vm605 = vmor %vm603, %vm604
        %v606 = vsel %vm605, %v597, %v602
        %v607 = vrsqrt.pop %v545
        %v608 = vmul.f32 %v607, %v545
        %v609 = vmul.f32 %v608, %v607
        %v610 = vmul.f32 0.5, %v609
        %v611 = vsub.f32 1.5, %v610
        %v612 = vmul.f32 %v607, %v611
        %vm613 = vweird.f32 %v545
        %vm614 = vweird.f32 %v607
        %vm615 = vmor %vm613, %vm614
        %v616 = vsel %vm615, %v607, %v612
        %v617 = vrsqrt.pop %v546
        %v618 = vmul.f32 %v617, %v546
        %v619 = vmul.f32 %v618, %v617
        %v620 = vmul.f32 0.5, %v619
        %v621 = vsub.f32 1.5, %v620
        %v622 = vmul.f32 %v617, %v621
        %vm623 = vweird.f32 %v546
        %vm624 = vweird.f32 %v617
        %vm625 = vmor %vm623, %vm624
        %v626 = vsel %vm625, %v617, %v622
        %v627 = vmul.f32 %v491, %v556
        %v628 = vmul.f32 %v492, %v566
        %v629 = vmul.f32 %v493, %v576
        %v630 = vmul.f32 %v494, %v586
        %v631 = vmul.f32 %v495, %v596
        %v632 = vmul.f32 %v496, %v606
        %v633 = vmul.f32 %v497, %v616
        %v634 = vmul.f32 %v498, %v626
        %v636 = vperm.slane %v449, 0
        %v638 = vmul.f32 %v627, %v636
        %v639 = vmul.f32 %v628, %v636
        %v640 = vmul.f32 %v629, %v636
        %v641 = vmul.f32 %v630, %v636
        %v642 = vmul.f32 %v631, %v636
        %v643 = vmul.f32 %v632, %v636
        %v644 = vmul.f32 %v633, %v636
        %v645 = vmul.f32 %v634, %v636
        %v647 = vperm.slane %v450, 0
        %v649 = vadd.f32 %v638, %v647
        %v650 = vadd.f32 %v639, %v647
        %v651 = vadd.f32 %v640, %v647
        %v652 = vadd.f32 %v641, %v647
        %v653 = vadd.f32 %v642, %v647
        %v654 = vadd.f32 %v643, %v647
        %v655 = vadd.f32 %v644, %v647
        %v656 = vadd.f32 %v645, %v647
        %v657 = vld [vmem:[%s429] sm:$0xff]
        %v658 = vld [vmem:[%s429 + $0x8] sm:$0xff]
        %v659 = vld [vmem:[%s429 + $0x10] sm:$0xff]
        %v660 = vld [vmem:[%s429 + $0x18] sm:$0xff]
        %v661 = vld [vmem:[%s429 + $0x20] sm:$0xff]
        %v662 = vld [vmem:[%s429 + $0x28] sm:$0xff]
        %v663 = vld [vmem:[%s429 + $0x30] sm:$0xff]
        %v664 = vld [vmem:[%s429 + $0x38] sm:$0xff]
        %v665 = vld [vmem:[%s4] sm:$0xff]
        %v666 = vld [vmem:[%s4 + $0x8] sm:$0xff]
        %v667 = vld [vmem:[%s4 + $0x10] sm:$0xff]
        %v668 = vld [vmem:[%s4 + $0x18] sm:$0xff]
        %v669 = vld [vmem:[%s4 + $0x20] sm:$0xff]
        %v670 = vld [vmem:[%s4 + $0x28] sm:$0xff]
        %v671 = vld [vmem:[%s4 + $0x30] sm:$0xff]
        %v672 = vld [vmem:[%s4 + $0x38] sm:$0xff]
        %v673 = vld [vmem:[%s5] sm:$0x3]
        %v675 = vperm.slane %v673, 0
        %v676 = vperm.slane %v673, 1
        %v680 = vsel %vm451, %v649, 0
        %v683 = vsel %vm451, %v650, 0
        %v686 = vsel %vm451, %v651, 0
        %v689 = vsel %vm451, %v652, 0
        %v692 = vsel %vm451, %v653, 0
        %v695 = vsel %vm451, %v654, 0
        %v698 = vsel %vm451, %v655, 0
        %v701 = vsel %vm451, %v656, 0
        %703 = vmatpush.msra.mxu0 0.0
        %704 = vmatpush.msra.mxu0 0.0
        %705 = vmatpush.msra.mxu0 0.0
        %706 = vmatpush.msra.mxu0 0.0
        %707 = vmatpush.msra.mxu0 0.0
        %708 = vmatpush.msra.mxu0 0.0
        %709 = vmatpush.msra.mxu0 0.0
        %710 = vmatpush.msra.mxu0 0.0
        %711 = vmatpush.msra.mxu0 0.0
        %712 = vmatpush.msra.mxu0 0.0
        %713 = vmatpush.msra.mxu0 0.0
        %714 = vmatpush.msra.mxu0 0.0
        %715 = vmatpush.msra.mxu0 %v671
        %716 = vmatpush.msra.mxu0 %v669
        %717 = vmatpush.msra.mxu0 %v667
        %718 = vmatpush.msra.mxu0 %v665
        %719 = vmatmul.f32.gmra.mxu0 %v680
        %v720 = vpop.f32.mrf.mxu0
        %v721 = vadd.f32 %v675, %v720
        %722 = vmatmul.f32.gmra.mxu0 %v683
        %v723 = vpop.f32.mrf.mxu0
        %v724 = vadd.f32 %v675, %v723
        %725 = vmatmul.f32.gmra.mxu0 %v686
        %v726 = vpop.f32.mrf.mxu0
        %v727 = vadd.f32 %v675, %v726
        %728 = vmatmul.f32.gmra.mxu0 %v689
        %v729 = vpop.f32.mrf.mxu0
        %v730 = vadd.f32 %v675, %v729
        %731 = vmatmul.f32.gmra.mxu0 %v692
        %v732 = vpop.f32.mrf.mxu0
        %v733 = vadd.f32 %v675, %v732
        %734 = vmatmul.f32.gmra.mxu0 %v695
        %v735 = vpop.f32.mrf.mxu0
        %v736 = vadd.f32 %v675, %v735
        %737 = vmatmul.f32.gmra.mxu0 %v698
        %v738 = vpop.f32.mrf.mxu0
        %v739 = vadd.f32 %v675, %v738
        %740 = vmatmul.f32.gmra.mxu0 %v701
        %v741 = vpop.f32.mrf.mxu0
        %v742 = vadd.f32 %v675, %v741
        %743 = vdwg.mxu0
        %744 = vmatpush.msra.mxu0 0.0
        %745 = vmatpush.msra.mxu0 0.0
        %746 = vmatpush.msra.mxu0 0.0
        %747 = vmatpush.msra.mxu0 0.0
        %748 = vmatpush.msra.mxu0 0.0
        %749 = vmatpush.msra.mxu0 0.0
        %750 = vmatpush.msra.mxu0 0.0
        %751 = vmatpush.msra.mxu0 0.0
        %752 = vmatpush.msra.mxu0 0.0
        %753 = vmatpush.msra.mxu0 0.0
        %754 = vmatpush.msra.mxu0 0.0
        %755 = vmatpush.msra.mxu0 0.0
        %756 = vmatpush.msra.mxu0 %v672
        %757 = vmatpush.msra.mxu0 %v670
        %758 = vmatpush.msra.mxu0 %v668
        %759 = vmatpush.msra.mxu0 %v666
        %760 = vmatmul.f32.gmra.mxu0 %v680
        %v761 = vpop.f32.mrf.mxu0
        %v762 = vadd.f32 %v676, %v761
        %763 = vmatmul.f32.gmra.mxu0 %v683
        %v764 = vpop.f32.mrf.mxu0
        %v765 = vadd.f32 %v676, %v764
        %766 = vmatmul.f32.gmra.mxu0 %v686
        %v767 = vpop.f32.mrf.mxu0
        %v768 = vadd.f32 %v676, %v767
        %769 = vmatmul.f32.gmra.mxu0 %v689
        %v770 = vpop.f32.mrf.mxu0
        %v771 = vadd.f32 %v676, %v770
        %772 = vmatmul.f32.gmra.mxu0 %v692
        %v773 = vpop.f32.mrf.mxu0
        %v774 = vadd.f32 %v676, %v773
        %775 = vmatmul.f32.gmra.mxu0 %v695
        %v776 = vpop.f32.mrf.mxu0
        %v777 = vadd.f32 %v676, %v776
        %778 = vmatmul.f32.gmra.mxu0 %v698
        %v779 = vpop.f32.mrf.mxu0
        %v780 = vadd.f32 %v676, %v779
        %781 = vmatmul.f32.gmra.mxu0 %v701
        %v782 = vpop.f32.mrf.mxu0
        %v783 = vadd.f32 %v676, %v782
        %784 = vdwg.mxu0
        %v785 = vxor.u32 %v721, 2147483648
        %v786 = vxor.u32 %v724, 2147483648
        %v787 = vxor.u32 %v727, 2147483648
        %v788 = vxor.u32 %v730, 2147483648
        %v789 = vxor.u32 %v733, 2147483648
        %v790 = vxor.u32 %v736, 2147483648
        %v791 = vxor.u32 %v739, 2147483648
        %v792 = vxor.u32 %v742, 2147483648
        %v793 = vmul.f32 %v785, 1.442695
        %v794 = vpow.pop %v793
        %v795 = vmul.f32 %v786, 1.442695
        %v796 = vpow.pop %v795
        %v797 = vmul.f32 %v787, 1.442695
        %v798 = vpow.pop %v797
        %v799 = vmul.f32 %v788, 1.442695
        %v800 = vpow.pop %v799
        %v801 = vmul.f32 %v789, 1.442695
        %v802 = vpow.pop %v801
        %v803 = vmul.f32 %v790, 1.442695
        %v804 = vpow.pop %v803
        %v805 = vmul.f32 %v791, 1.442695
        %v806 = vpow.pop %v805
        %v807 = vmul.f32 %v792, 1.442695
        %v808 = vpow.pop %v807
        %v809 = vadd.f32 %v794, 1.0
        %v810 = vadd.f32 %v796, 1.0
        %v811 = vadd.f32 %v798, 1.0
        %v812 = vadd.f32 %v800, 1.0
        %v813 = vadd.f32 %v802, 1.0
        %v814 = vadd.f32 %v804, 1.0
        %v815 = vadd.f32 %v806, 1.0
        %v816 = vadd.f32 %v808, 1.0
        %v817 = vrcp.pop %v809
        %v818 = vmul.f32 %v809, %v817
        %v819 = vsub.f32 1.0, %v818
        %v820 = vmul.f32 %v817, %v819
        %v821 = vadd.f32 %v817, %v820
        %vm822 = vweird.f32 %v809
        %vm823 = vweird.f32 %v817
        %vm824 = vmor %vm822, %vm823
        %v825 = vsel %vm824, %v817, %v821
        %v826 = vand.u32 2147483647, %v809
        %vm827 = vcmp.eq.f32.partialorder %v826, 8.507059e+37
        %v828 = vand.u32 %v809, 2147483648
        %v829 = vor.u32 1.1754944e-38, %v828
        %v830 = vsel %vm827, %v829, %v825
        %v831 = vmul.f32 1.0, %v830
        %v832 = vrcp.pop %v810
        %v833 = vmul.f32 %v810, %v832
        %v834 = vsub.f32 1.0, %v833
        %v835 = vmul.f32 %v832, %v834
        %v836 = vadd.f32 %v832, %v835
        %vm837 = vweird.f32 %v810
        %vm838 = vweird.f32 %v832
        %vm839 = vmor %vm837, %vm838
        %v840 = vsel %vm839, %v832, %v836
        %v841 = vand.u32 2147483647, %v810
        %vm842 = vcmp.eq.f32.partialorder %v841, 8.507059e+37
        %v843 = vand.u32 %v810, 2147483648
        %v844 = vor.u32 1.1754944e-38, %v843
        %v845 = vsel %vm842, %v844, %v840
        %v846 = vmul.f32 1.0, %v845
        %v847 = vrcp.pop %v811
        %v848 = vmul.f32 %v811, %v847
        %v849 = vsub.f32 1.0, %v848
        %v850 = vmul.f32 %v847, %v849
        %v851 = vadd.f32 %v847, %v850
        %vm852 = vweird.f32 %v811
        %vm853 = vweird.f32 %v847
        %vm854 = vmor %vm852, %vm853
        %v855 = vsel %vm854, %v847, %v851
        %v856 = vand.u32 2147483647, %v811
        %vm857 = vcmp.eq.f32.partialorder %v856, 8.507059e+37
        %v858 = vand.u32 %v811, 2147483648
        %v859 = vor.u32 1.1754944e-38, %v858
        %v860 = vsel %vm857, %v859, %v855
        %v861 = vmul.f32 1.0, %v860
        %v862 = vrcp.pop %v812
        %v863 = vmul.f32 %v812, %v862
        %v864 = vsub.f32 1.0, %v863
        %v865 = vmul.f32 %v862, %v864
        %v866 = vadd.f32 %v862, %v865
        %vm867 = vweird.f32 %v812
        %vm868 = vweird.f32 %v862
        %vm869 = vmor %vm867, %vm868
        %v870 = vsel %vm869, %v862, %v866
        %v871 = vand.u32 2147483647, %v812
        %vm872 = vcmp.eq.f32.partialorder %v871, 8.507059e+37
        %v873 = vand.u32 %v812, 2147483648
        %v874 = vor.u32 1.1754944e-38, %v873
        %v875 = vsel %vm872, %v874, %v870
        %v876 = vmul.f32 1.0, %v875
        %v877 = vrcp.pop %v813
        %v878 = vmul.f32 %v813, %v877
        %v879 = vsub.f32 1.0, %v878
        %v880 = vmul.f32 %v877, %v879
        %v881 = vadd.f32 %v877, %v880
        %vm882 = vweird.f32 %v813
        %vm883 = vweird.f32 %v877
        %vm884 = vmor %vm882, %vm883
        %v885 = vsel %vm884, %v877, %v881
        %v886 = vand.u32 2147483647, %v813
        %vm887 = vcmp.eq.f32.partialorder %v886, 8.507059e+37
        %v888 = vand.u32 %v813, 2147483648
        %v889 = vor.u32 1.1754944e-38, %v888
        %v890 = vsel %vm887, %v889, %v885
        %v891 = vmul.f32 1.0, %v890
        %v892 = vrcp.pop %v814
        %v893 = vmul.f32 %v814, %v892
        %v894 = vsub.f32 1.0, %v893
        %v895 = vmul.f32 %v892, %v894
        %v896 = vadd.f32 %v892, %v895
        %vm897 = vweird.f32 %v814
        %vm898 = vweird.f32 %v892
        %vm899 = vmor %vm897, %vm898
        %v900 = vsel %vm899, %v892, %v896
        %v901 = vand.u32 2147483647, %v814
        %vm902 = vcmp.eq.f32.partialorder %v901, 8.507059e+37
        %v903 = vand.u32 %v814, 2147483648
        %v904 = vor.u32 1.1754944e-38, %v903
        %v905 = vsel %vm902, %v904, %v900
        %v906 = vmul.f32 1.0, %v905
        %v907 = vrcp.pop %v815
        %v908 = vmul.f32 %v815, %v907
        %v909 = vsub.f32 1.0, %v908
        %v910 = vmul.f32 %v907, %v909
        %v911 = vadd.f32 %v907, %v910
        %vm912 = vweird.f32 %v815
        %vm913 = vweird.f32 %v907
        %vm914 = vmor %vm912, %vm913
        %v915 = vsel %vm914, %v907, %v911
        %v916 = vand.u32 2147483647, %v815
        %vm917 = vcmp.eq.f32.partialorder %v916, 8.507059e+37
        %v918 = vand.u32 %v815, 2147483648
        %v919 = vor.u32 1.1754944e-38, %v918
        %v920 = vsel %vm917, %v919, %v915
        %v921 = vmul.f32 1.0, %v920
        %v922 = vrcp.pop %v816
        %v923 = vmul.f32 %v816, %v922
        %v924 = vsub.f32 1.0, %v923
        %v925 = vmul.f32 %v922, %v924
        %v926 = vadd.f32 %v922, %v925
        %vm927 = vweird.f32 %v816
        %vm928 = vweird.f32 %v922
        %vm929 = vmor %vm927, %vm928
        %v930 = vsel %vm929, %v922, %v926
        %v931 = vand.u32 2147483647, %v816
        %vm932 = vcmp.eq.f32.partialorder %v931, 8.507059e+37
        %v933 = vand.u32 %v816, 2147483648
        %v934 = vor.u32 1.1754944e-38, %v933
        %v935 = vsel %vm932, %v934, %v930
        %v936 = vmul.f32 1.0, %v935
        %945 = vrot.lane.b32.xlu0 %v831, 96
        %v946 = vpop.permute.xlu0 %945
        %947 = vrot.lane.b32.xlu0 %v846, 96
        %v948 = vpop.permute.xlu0 %947
        %949 = vrot.lane.b32.xlu0 %v861, 96
        %v950 = vpop.permute.xlu0 %949
        %951 = vrot.lane.b32.xlu0 %v876, 96
        %v952 = vpop.permute.xlu0 %951
        %953 = vrot.lane.b32.xlu0 %v891, 96
        %v954 = vpop.permute.xlu0 %953
        %955 = vrot.lane.b32.xlu0 %v906, 96
        %v956 = vpop.permute.xlu0 %955
        %957 = vrot.lane.b32.xlu0 %v921, 96
        %v958 = vpop.permute.xlu0 %957
        %959 = vrot.lane.b32.xlu0 %v936, 96
        %v960 = vpop.permute.xlu0 %959
        %v969 = vmul.f32 %v721, %v946
        %v970 = vmul.f32 %v724, %v948
        %v971 = vmul.f32 %v727, %v950
        %v972 = vmul.f32 %v730, %v952
        %v973 = vmul.f32 %v733, %v954
        %v974 = vmul.f32 %v736, %v956
        %v975 = vmul.f32 %v739, %v958
        %v976 = vmul.f32 %v742, %v960
        %978 = vset.pattern.permute.xlu0 0
        %979 = vperm.xlu0 %978, %v657
        %v980 = vpop.permute.xlu0 %979
        %983 = vset.pattern.permute.xlu0 0
        %984 = vperm.xlu0 %983, %v658
        %v985 = vpop.permute.xlu0 %984
        %988 = vset.pattern.permute.xlu0 0
        %989 = vperm.xlu0 %988, %v659
        %v990 = vpop.permute.xlu0 %989
        %993 = vset.pattern.permute.xlu0 0
        %994 = vperm.xlu0 %993, %v660
        %v995 = vpop.permute.xlu0 %994
        %998 = vset.pattern.permute.xlu0 0
        %999 = vperm.xlu0 %998, %v661
        %v1000 = vpop.permute.xlu0 %999
        %1003 = vset.pattern.permute.xlu0 0
        %1004 = vperm.xlu0 %1003, %v662
        %v1005 = vpop.permute.xlu0 %1004
        %1008 = vset.pattern.permute.xlu0 0
        %1009 = vperm.xlu0 %1008, %v663
        %v1010 = vpop.permute.xlu0 %1009
        %1013 = vset.pattern.permute.xlu0 0
        %1014 = vperm.xlu0 %1013, %v664
        %v1015 = vpop.permute.xlu0 %1014
        %v1017 = vmul.f32 %v969, %v980
        %v1018 = vmul.f32 %v970, %v985
        %v1019 = vmul.f32 %v971, %v990
        %v1020 = vmul.f32 %v972, %v995
        %v1021 = vmul.f32 %v973, %v1000
        %v1022 = vmul.f32 %v974, %v1005
        %v1023 = vmul.f32 %v975, %v1010
        %v1024 = vmul.f32 %v976, %v1015
        %1025 = vxpose.xlu0.b32.start [1/16] %v1017, 128
        %1026 = vxpose.xlu0.b32.cont [2/16] %v1018, 128
        %1027 = vxpose.xlu0.b32.cont [3/16] %v1019, 128
        %1028 = vxpose.xlu0.b32.cont [4/16] %v1020, 128
        %1029 = vxpose.xlu0.b32.cont [5/16] %v1021, 128
        %1030 = vxpose.xlu0.b32.cont [6/16] %v1022, 128
        %1031 = vxpose.xlu0.b32.cont [7/16] %v1023, 128
        %1032 = vxpose.xlu0.b32.cont [8/16] %v1024, 128
        %1033 = vxpose.xlu0.b32.cont [9/16] 0.0, 128
        %1034 = vxpose.xlu0.b32.cont [10/16] 0.0, 128
        %1035 = vxpose.xlu0.b32.cont [11/16] 0.0, 128
        %1036 = vxpose.xlu0.b32.cont [12/16] 0.0, 128
        %1037 = vxpose.xlu0.b32.cont [13/16] 0.0, 128
        %1038 = vxpose.xlu0.b32.cont [14/16] 0.0, 128
        %1039 = vxpose.xlu0.b32.cont [15/16] 0.0, 128
        %1040 = vxpose.xlu0.b32.end [16/16] 0.0, 128
        %v1041 = vpop.trf.xlu0
        %v1042 = vpop.trf.xlu0
        %v1043 = vpop.trf.xlu0
        %v1044 = vpop.trf.xlu0
        %v1045 = vpop.trf.xlu0
        %v1046 = vpop.trf.xlu0
        %v1047 = vpop.trf.xlu0
        %v1048 = vpop.trf.xlu0
        %v1049 = vpop.trf.xlu0
        %v1050 = vpop.trf.xlu0
        %v1051 = vpop.trf.xlu0
        %v1052 = vpop.trf.xlu0
        %v1053 = vpop.trf.xlu0
        %v1054 = vpop.trf.xlu0
        %v1055 = vpop.trf.xlu0
        %v1056 = vpop.trf.xlu0
        %v1057 = vpack.c.bf16 %v1041, %v1041
        %v1058 = vpack.c.bf16 %v1042, %v1042
        %v1059 = vpack.c.bf16 %v1043, %v1043
        %v1060 = vpack.c.bf16 %v1044, %v1044
        %vm1061 = vcmask 519168
        %1062 = vst.msk [vmem:[%s386] sm:$0xf] %vm1061, %v1057
        %1063 = vst.msk [vmem:[%s386 + $0x4] sm:$0xf] %vm1061, %v1058
        %1064 = vst.msk [vmem:[%s386 + $0x8] sm:$0xf] %vm1061, %v1059
        %1065 = vst.msk [vmem:[%s386 + $0xc] sm:$0xf] %vm1061, %v1060
        %1074 = vrot.lane.b32.xlu0 %v1017, 64
        %v1075 = vpop.permute.xlu0 %1074
        %1076 = vrot.lane.b32.xlu0 %v1018, 64
        %v1077 = vpop.permute.xlu0 %1076
        %1078 = vrot.lane.b32.xlu0 %v1019, 64
        %v1079 = vpop.permute.xlu0 %1078
        %1080 = vrot.lane.b32.xlu0 %v1020, 64
        %v1081 = vpop.permute.xlu0 %1080
        %1082 = vrot.lane.b32.xlu0 %v1021, 64
        %v1083 = vpop.permute.xlu0 %1082
        %1084 = vrot.lane.b32.xlu0 %v1022, 64
        %v1085 = vpop.permute.xlu0 %1084
        %1086 = vrot.lane.b32.xlu0 %v1023, 64
        %v1087 = vpop.permute.xlu0 %1086
        %1088 = vrot.lane.b32.xlu0 %v1024, 64
        %v1089 = vpop.permute.xlu0 %1088
        %1098 = vxpose.xlu0.b32.start [1/16] %v1075, 128
        %1099 = vxpose.xlu0.b32.cont [2/16] %v1077, 128
        %1100 = vxpose.xlu0.b32.cont [3/16] %v1079, 128
        %1101 = vxpose.xlu0.b32.cont [4/16] %v1081, 128
        %1102 = vxpose.xlu0.b32.cont [5/16] %v1083, 128
        %1103 = vxpose.xlu0.b32.cont [6/16] %v1085, 128
        %1104 = vxpose.xlu0.b32.cont [7/16] %v1087, 128
        %1105 = vxpose.xlu0.b32.cont [8/16] %v1089, 128
        %1106 = vxpose.xlu0.b32.cont [9/16] 0.0, 128
        %1107 = vxpose.xlu0.b32.cont [10/16] 0.0, 128
        %1108 = vxpose.xlu0.b32.cont [11/16] 0.0, 128
        %1109 = vxpose.xlu0.b32.cont [12/16] 0.0, 128
        %1110 = vxpose.xlu0.b32.cont [13/16] 0.0, 128
        %1111 = vxpose.xlu0.b32.cont [14/16] 0.0, 128
        %1112 = vxpose.xlu0.b32.cont [15/16] 0.0, 128
        %1113 = vxpose.xlu0.b32.end [16/16] 0.0, 128
        %v1114 = vpop.trf.xlu0
        %v1115 = vpop.trf.xlu0
        %v1116 = vpop.trf.xlu0
        %v1117 = vpop.trf.xlu0
        %v1118 = vpop.trf.xlu0
        %v1119 = vpop.trf.xlu0
        %v1120 = vpop.trf.xlu0
        %v1121 = vpop.trf.xlu0
        %v1122 = vpop.trf.xlu0
        %v1123 = vpop.trf.xlu0
        %v1124 = vpop.trf.xlu0
        %v1125 = vpop.trf.xlu0
        %v1126 = vpop.trf.xlu0
        %v1127 = vpop.trf.xlu0
        %v1128 = vpop.trf.xlu0
        %v1129 = vpop.trf.xlu0
        %v1130 = vpack.c.bf16 %v1114, %v1114
        %v1131 = vpack.c.bf16 %v1115, %v1115
        %v1132 = vpack.c.bf16 %v1116, %v1116
        %v1133 = vpack.c.bf16 %v1117, %v1117
        %1134 = vst.msk [vmem:[%s393] sm:$0xf] %vm1061, %v1130
        %1135 = vst.msk [vmem:[%s393 + $0x4] sm:$0xf] %vm1061, %v1131
        %1136 = vst.msk [vmem:[%s393 + $0x8] sm:$0xf] %vm1061, %v1132
        %1137 = vst.msk [vmem:[%s393 + $0xc] sm:$0xf] %vm1061, %v1133
        %v1138 = vxor.u32 %v762, 2147483648
        %v1139 = vxor.u32 %v765, 2147483648
        %v1140 = vxor.u32 %v768, 2147483648
        %v1141 = vxor.u32 %v771, 2147483648
        %v1142 = vxor.u32 %v774, 2147483648
        %v1143 = vxor.u32 %v777, 2147483648
        %v1144 = vxor.u32 %v780, 2147483648
        %v1145 = vxor.u32 %v783, 2147483648
        %v1146 = vmul.f32 %v1138, 1.442695
        %v1147 = vpow.pop %v1146
        %v1148 = vmul.f32 %v1139, 1.442695
        %v1149 = vpow.pop %v1148
        %v1150 = vmul.f32 %v1140, 1.442695
        %v1151 = vpow.pop %v1150
        %v1152 = vmul.f32 %v1141, 1.442695
        %v1153 = vpow.pop %v1152
        %v1154 = vmul.f32 %v1142, 1.442695
        %v1155 = vpow.pop %v1154
        %v1156 = vmul.f32 %v1143, 1.442695
        %v1157 = vpow.pop %v1156
        %v1158 = vmul.f32 %v1144, 1.442695
        %v1159 = vpow.pop %v1158
        %v1160 = vmul.f32 %v1145, 1.442695
        %v1161 = vpow.pop %v1160
        %v1162 = vadd.f32 %v1147, 1.0
        %v1163 = vadd.f32 %v1149, 1.0
        %v1164 = vadd.f32 %v1151, 1.0
        %v1165 = vadd.f32 %v1153, 1.0
        %v1166 = vadd.f32 %v1155, 1.0
        %v1167 = vadd.f32 %v1157, 1.0
        %v1168 = vadd.f32 %v1159, 1.0
        %v1169 = vadd.f32 %v1161, 1.0
        %v1170 = vrcp.pop %v1162
        %v1171 = vmul.f32 %v1162, %v1170
        %v1172 = vsub.f32 1.0, %v1171
        %v1173 = vmul.f32 %v1170, %v1172
        %v1174 = vadd.f32 %v1170, %v1173
        %vm1175 = vweird.f32 %v1162
        %vm1176 = vweird.f32 %v1170
        %vm1177 = vmor %vm1175, %vm1176
        %v1178 = vsel %vm1177, %v1170, %v1174
        %v1179 = vand.u32 2147483647, %v1162
        %vm1180 = vcmp.eq.f32.partialorder %v1179, 8.507059e+37
        %v1181 = vand.u32 %v1162, 2147483648
        %v1182 = vor.u32 1.1754944e-38, %v1181
        %v1183 = vsel %vm1180, %v1182, %v1178
        %v1184 = vmul.f32 1.0, %v1183
        %v1185 = vrcp.pop %v1163
        %v1186 = vmul.f32 %v1163, %v1185
        %v1187 = vsub.f32 1.0, %v1186
        %v1188 = vmul.f32 %v1185, %v1187
        %v1189 = vadd.f32 %v1185, %v1188
        %vm1190 = vweird.f32 %v1163
        %vm1191 = vweird.f32 %v1185
        %vm1192 = vmor %vm1190, %vm1191
        %v1193 = vsel %vm1192, %v1185, %v1189
        %v1194 = vand.u32 2147483647, %v1163
        %vm1195 = vcmp.eq.f32.partialorder %v1194, 8.507059e+37
        %v1196 = vand.u32 %v1163, 2147483648
        %v1197 = vor.u32 1.1754944e-38, %v1196
        %v1198 = vsel %vm1195, %v1197, %v1193
        %v1199 = vmul.f32 1.0, %v1198
        %v1200 = vrcp.pop %v1164
        %v1201 = vmul.f32 %v1164, %v1200
        %v1202 = vsub.f32 1.0, %v1201
        %v1203 = vmul.f32 %v1200, %v1202
        %v1204 = vadd.f32 %v1200, %v1203
        %vm1205 = vweird.f32 %v1164
        %vm1206 = vweird.f32 %v1200
        %vm1207 = vmor %vm1205, %vm1206
        %v1208 = vsel %vm1207, %v1200, %v1204
        %v1209 = vand.u32 2147483647, %v1164
        %vm1210 = vcmp.eq.f32.partialorder %v1209, 8.507059e+37
        %v1211 = vand.u32 %v1164, 2147483648
        %v1212 = vor.u32 1.1754944e-38, %v1211
        %v1213 = vsel %vm1210, %v1212, %v1208
        %v1214 = vmul.f32 1.0, %v1213
        %v1215 = vrcp.pop %v1165
        %v1216 = vmul.f32 %v1165, %v1215
        %v1217 = vsub.f32 1.0, %v1216
        %v1218 = vmul.f32 %v1215, %v1217
        %v1219 = vadd.f32 %v1215, %v1218
        %vm1220 = vweird.f32 %v1165
        %vm1221 = vweird.f32 %v1215
        %vm1222 = vmor %vm1220, %vm1221
        %v1223 = vsel %vm1222, %v1215, %v1219
        %v1224 = vand.u32 2147483647, %v1165
        %vm1225 = vcmp.eq.f32.partialorder %v1224, 8.507059e+37
        %v1226 = vand.u32 %v1165, 2147483648
        %v1227 = vor.u32 1.1754944e-38, %v1226
        %v1228 = vsel %vm1225, %v1227, %v1223
        %v1229 = vmul.f32 1.0, %v1228
        %v1230 = vrcp.pop %v1166
        %v1231 = vmul.f32 %v1166, %v1230
        %v1232 = vsub.f32 1.0, %v1231
        %v1233 = vmul.f32 %v1230, %v1232
        %v1234 = vadd.f32 %v1230, %v1233
        %vm1235 = vweird.f32 %v1166
        %vm1236 = vweird.f32 %v1230
        %vm1237 = vmor %vm1235, %vm1236
        %v1238 = vsel %vm1237, %v1230, %v1234
        %v1239 = vand.u32 2147483647, %v1166
        %vm1240 = vcmp.eq.f32.partialorder %v1239, 8.507059e+37
        %v1241 = vand.u32 %v1166, 2147483648
        %v1242 = vor.u32 1.1754944e-38, %v1241
        %v1243 = vsel %vm1240, %v1242, %v1238
        %v1244 = vmul.f32 1.0, %v1243
        %v1245 = vrcp.pop %v1167
        %v1246 = vmul.f32 %v1167, %v1245
        %v1247 = vsub.f32 1.0, %v1246
        %v1248 = vmul.f32 %v1245, %v1247
        %v1249 = vadd.f32 %v1245, %v1248
        %vm1250 = vweird.f32 %v1167
        %vm1251 = vweird.f32 %v1245
        %vm1252 = vmor %vm1250, %vm1251
        %v1253 = vsel %vm1252, %v1245, %v1249
        %v1254 = vand.u32 2147483647, %v1167
        %vm1255 = vcmp.eq.f32.partialorder %v1254, 8.507059e+37
        %v1256 = vand.u32 %v1167, 2147483648
        %v1257 = vor.u32 1.1754944e-38, %v1256
        %v1258 = vsel %vm1255, %v1257, %v1253
        %v1259 = vmul.f32 1.0, %v1258
        %v1260 = vrcp.pop %v1168
        %v1261 = vmul.f32 %v1168, %v1260
        %v1262 = vsub.f32 1.0, %v1261
        %v1263 = vmul.f32 %v1260, %v1262
        %v1264 = vadd.f32 %v1260, %v1263
        %vm1265 = vweird.f32 %v1168
        %vm1266 = vweird.f32 %v1260
        %vm1267 = vmor %vm1265, %vm1266
        %v1268 = vsel %vm1267, %v1260, %v1264
        %v1269 = vand.u32 2147483647, %v1168
        %vm1270 = vcmp.eq.f32.partialorder %v1269, 8.507059e+37
        %v1271 = vand.u32 %v1168, 2147483648
        %v1272 = vor.u32 1.1754944e-38, %v1271
        %v1273 = vsel %vm1270, %v1272, %v1268
        %v1274 = vmul.f32 1.0, %v1273
        %v1275 = vrcp.pop %v1169
        %v1276 = vmul.f32 %v1169, %v1275
        %v1277 = vsub.f32 1.0, %v1276
        %v1278 = vmul.f32 %v1275, %v1277
        %v1279 = vadd.f32 %v1275, %v1278
        %vm1280 = vweird.f32 %v1169
        %vm1281 = vweird.f32 %v1275
        %vm1282 = vmor %vm1280, %vm1281
        %v1283 = vsel %vm1282, %v1275, %v1279
        %v1284 = vand.u32 2147483647, %v1169
        %vm1285 = vcmp.eq.f32.partialorder %v1284, 8.507059e+37
        %v1286 = vand.u32 %v1169, 2147483648
        %v1287 = vor.u32 1.1754944e-38, %v1286
        %v1288 = vsel %vm1285, %v1287, %v1283
        %v1289 = vmul.f32 1.0, %v1288
        %1290 = vst.msk [vmem:[%s439] sm:$0xff] %vm451, %v1184
        %1291 = vst.msk [vmem:[%s439 + $0x8] sm:$0xff] %vm451, %v1199
        %1292 = vst.msk [vmem:[%s439 + $0x10] sm:$0xff] %vm451, %v1214
        %1293 = vst.msk [vmem:[%s439 + $0x18] sm:$0xff] %vm451, %v1229
        %1294 = vst.msk [vmem:[%s439 + $0x20] sm:$0xff] %vm451, %v1244
        %1295 = vst.msk [vmem:[%s439 + $0x28] sm:$0xff] %vm451, %v1259
        %1296 = vst.msk [vmem:[%s439 + $0x30] sm:$0xff] %vm451, %v1274
        %1297 = vst.msk [vmem:[%s439 + $0x38] sm:$0xff] %vm451, %v1289
        %v1298 = vlaneseq
        %v1299 = vand.u32 %v1298, 127
        %vm1300 = vcmp.eq.s32.totalorder %v1299, 0
        %v1301 = vsel %vm451, %v1017, 0.0
        %v1302 = vsel %vm451, %v1018, 0.0
        %v1303 = vadd.f32 %v1301, %v1302
        %v1304 = vsel %vm451, %v1019, 0.0
        %v1305 = vadd.f32 %v1303, %v1304
        %v1306 = vsel %vm451, %v1020, 0.0
        %v1307 = vadd.f32 %v1305, %v1306
        %v1308 = vsel %vm451, %v1021, 0.0
        %v1309 = vadd.f32 %v1307, %v1308
        %v1310 = vsel %vm451, %v1022, 0.0
        %v1311 = vadd.f32 %v1309, %v1310
        %v1312 = vsel %vm451, %v1023, 0.0
        %v1313 = vadd.f32 %v1311, %v1312
        %v1314 = vsel %vm451, %v1024, 0.0
        %v1315 = vadd.f32 %v1313, %v1314
        %1316 = vadd.xlane.f32.xlu0 %v1315
        %v1317 = vpop.xlane.xlu0 %1316
        %v1318 = vrot.slane %v1317, 4
        %v1319 = vadd.f32 %v1317, %v1318
        %v1320 = vrot.slane %v1319, 2
        %v1321 = vadd.f32 %v1319, %v1320
        %v1322 = vrot.slane %v1321, 1
        %v1323 = vadd.f32 %v1321, %v1322
        %s1324 = vtos %v1323
        %v1325 = vstv %s1324
        %v1326 = vsel %vm1300, %v1325, 0.0
        %vm1327 = vcmp.eq.s32.totalorder %v1299, 1
        %v1328 = vmul.f32 %v1017, %v1017
        %v1329 = vmul.f32 %v1018, %v1018
        %v1330 = vmul.f32 %v1019, %v1019
        %v1331 = vmul.f32 %v1020, %v1020
        %v1332 = vmul.f32 %v1021, %v1021
        %v1333 = vmul.f32 %v1022, %v1022
        %v1334 = vmul.f32 %v1023, %v1023
        %v1335 = vmul.f32 %v1024, %v1024
        %v1336 = vsel %vm451, %v1328, 0.0
        %v1337 = vsel %vm451, %v1329, 0.0
        %v1338 = vadd.f32 %v1336, %v1337
        %v1339 = vsel %vm451, %v1330, 0.0
        %v1340 = vadd.f32 %v1338, %v1339
        %v1341 = vsel %vm451, %v1331, 0.0
        %v1342 = vadd.f32 %v1340, %v1341
        %v1343 = vsel %vm451, %v1332, 0.0
        %v1344 = vadd.f32 %v1342, %v1343
        %v1345 = vsel %vm451, %v1333, 0.0
        %v1346 = vadd.f32 %v1344, %v1345
        %v1347 = vsel %vm451, %v1334, 0.0
        %v1348 = vadd.f32 %v1346, %v1347
        %v1349 = vsel %vm451, %v1335, 0.0
        %v1350 = vadd.f32 %v1348, %v1349
        %1351 = vadd.xlane.f32.xlu0 %v1350
        %v1352 = vpop.xlane.xlu0 %1351
        %v1353 = vrot.slane %v1352, 4
        %v1354 = vadd.f32 %v1352, %v1353
        %v1355 = vrot.slane %v1354, 2
        %v1356 = vadd.f32 %v1354, %v1355
        %v1357 = vrot.slane %v1356, 1
        %v1358 = vadd.f32 %v1356, %v1357
        %s1359 = vtos %v1358
        %v1360 = vstv %s1359
        %v1361 = vsel %vm1327, %v1360, 0.0
        %v1362 = vadd.f32 %v1326, %v1361
        %vm1363 = vcmp.eq.s32.totalorder %v1299, 2
        %v1364 = vsel %vm451, %v1075, 0.0
        %v1365 = vsel %vm451, %v1077, 0.0
        %v1366 = vadd.f32 %v1364, %v1365
        %v1367 = vsel %vm451, %v1079, 0.0
        %v1368 = vadd.f32 %v1366, %v1367
        %v1369 = vsel %vm451, %v1081, 0.0
        %v1370 = vadd.f32 %v1368, %v1369
        %v1371 = vsel %vm451, %v1083, 0.0
        %v1372 = vadd.f32 %v1370, %v1371
        %v1373 = vsel %vm451, %v1085, 0.0
        %v1374 = vadd.f32 %v1372, %v1373
        %v1375 = vsel %vm451, %v1087, 0.0
        %v1376 = vadd.f32 %v1374, %v1375
        %v1377 = vsel %vm451, %v1089, 0.0
        %v1378 = vadd.f32 %v1376, %v1377
        %1379 = vadd.xlane.f32.xlu0 %v1378
        %v1380 = vpop.xlane.xlu0 %1379
        %v1381 = vrot.slane %v1380, 4
        %v1382 = vadd.f32 %v1380, %v1381
        %v1383 = vrot.slane %v1382, 2
        %v1384 = vadd.f32 %v1382, %v1383
        %v1385 = vrot.slane %v1384, 1
        %v1386 = vadd.f32 %v1384, %v1385
        %s1387 = vtos %v1386
        %v1388 = vstv %s1387
        %v1389 = vsel %vm1363, %v1388, 0.0
        %v1390 = vadd.f32 %v1362, %v1389
        %vm1391 = vcmp.eq.s32.totalorder %v1299, 3
        %1400 = vrot.lane.b32.xlu0 %v1328, 64
        %v1401 = vpop.permute.xlu0 %1400
        %1402 = vrot.lane.b32.xlu0 %v1329, 64
        %v1403 = vpop.permute.xlu0 %1402
        %1404 = vrot.lane.b32.xlu0 %v1330, 64
        %v1405 = vpop.permute.xlu0 %1404
        %1406 = vrot.lane.b32.xlu0 %v1331, 64
        %v1407 = vpop.permute.xlu0 %1406
        %1408 = vrot.lane.b32.xlu0 %v1332, 64
        %v1409 = vpop.permute.xlu0 %1408
        %1410 = vrot.lane.b32.xlu0 %v1333, 64
        %v1411 = vpop.permute.xlu0 %1410
        %1412 = vrot.lane.b32.xlu0 %v1334, 64
        %v1413 = vpop.permute.xlu0 %1412
        %1414 = vrot.lane.b32.xlu0 %v1335, 64
        %v1415 = vpop.permute.xlu0 %1414
        %v1424 = vsel %vm451, %v1401, 0.0
        %v1425 = vsel %vm451, %v1403, 0.0
        %v1426 = vadd.f32 %v1424, %v1425
        %v1427 = vsel %vm451, %v1405, 0.0
        %v1428 = vadd.f32 %v1426, %v1427
        %v1429 = vsel %vm451, %v1407, 0.0
        %v1430 = vadd.f32 %v1428, %v1429
        %v1431 = vsel %vm451, %v1409, 0.0
        %v1432 = vadd.f32 %v1430, %v1431
        %v1433 = vsel %vm451, %v1411, 0.0
        %v1434 = vadd.f32 %v1432, %v1433
        %v1435 = vsel %vm451, %v1413, 0.0
        %v1436 = vadd.f32 %v1434, %v1435
        %v1437 = vsel %vm451, %v1415, 0.0
        %v1438 = vadd.f32 %v1436, %v1437
        %1439 = vadd.xlane.f32.xlu0 %v1438
        %v1440 = vpop.xlane.xlu0 %1439
        %v1441 = vrot.slane %v1440, 4
        %v1442 = vadd.f32 %v1440, %v1441
        %v1443 = vrot.slane %v1442, 2
        %v1444 = vadd.f32 %v1442, %v1443
        %v1445 = vrot.slane %v1444, 1
        %v1446 = vadd.f32 %v1444, %v1445
        %s1447 = vtos %v1446
        %v1448 = vstv %s1447
        %v1449 = vsel %vm1391, %v1448, 0.0
        %v1450 = vadd.f32 %v1390, %v1449
        %1451 = vst [vmem:[%s410] sm:$0x1] %v1450
        %s1452 = sand.u32 %s189, 1
        %s1453 = scalar_lea.sflag [#allocation3], %s1452
        %s1454 = sand.u32 %s189, 1
        %s1455 = smul.addr %s1454, 16
        %s1456 = scalar_lea.vmem [#allocation2], %s1455
        %s1457 = sand.u32 %s27, 1
        %s1458 = scalar_lea.sflag [#allocation5], %s1457
        %s1459 = sand.u32 %s217, 1
        %s1460 = smul.addr %s1459, 16
        %s1461 = scalar_lea.vmem [#allocation4], %s1460
        %s1462 = smul.u32 8, %s32
        %p1463 = scmp.lt.s32.totalorder %s31, 1
        %s1464 = scalar_select %p1463, %s31, 1
        %p1465 = scmp.lt.s32.totalorder %s1462, 7
        %s1466 = scalar_select %p1465, %s1462, 7
        %s1467 = smul.addr %s1464, 8
        %s1468 = sadd.s32 %s1466, %s1467
        %s1469 = smul.addr %s1468, 8
        %s1470 = scalar_lea.vmem %s8, %s1469
        %s1471 = sand.u32 %s27, 1
        %s1472 = scalar_lea.sflag [#allocation5], %s1471
        %s1473 = sand.u32 %s273, 1
        %s1474 = scalar_lea.vmem [#allocation6], %s1473
        // Predicated region
        $region45: #{tpu_custom_call.1} parent=43 // pred_check
          %p1475 = pneg %p199
        $region46: #{tpu_custom_call.1} parent=43 // pred_check_branch
          %1477 = sbr.rel (%p1475) target = $region48
        $region47: #{tpu_custom_call.1} parent=43 // pred_region
          %1479 = vsyncadd %s1453, 0
          %s1480 = smul.addr %s31, 4
          %s1481 = sadd.s32 %s32, %s1480
          %s1482 = smul.addr %s1481, 4
          %s1483 = scalar_lea.hbm %s6, %s1482
          %s1484 = sshll.u32 %s1456, 4
          %s1485 = int_to_ptr.vmem [resolvable:$true] %s1484
          %s1486 = sshll.u32 %s1483, 4
          %s1487 = int_to_ptr.hbm [resolvable:$true] %s1486
          %1492 = dma.vmem_to_hbm [thread:$0]  %s1485, 256, %s1487, %s1453, 64, 64, 4
        $region48: #{tpu_custom_call.1} parent=43 // pred_fallthru
          _
        // Predicated region
        $region49: #{tpu_custom_call.1} parent=43 // pred_check
          %p1493 = pneg %p227
        $region50: #{tpu_custom_call.1} parent=43 // pred_check_branch
          %1495 = sbr.rel (%p1493) target = $region52
        $region51: #{tpu_custom_call.1} parent=43 // pred_region
          %1497 = vsyncadd %s1458, 0
          %s1498 = smul.addr %s31, 4
          %s1499 = sadd.s32 %s32, %s1498
          %s1500 = smul.addr %s1499, 4
          %s1501 = scalar_lea.hbm %s7, %s1500
          %s1502 = sshll.u32 %s1461, 4
          %s1503 = int_to_ptr.vmem [resolvable:$true] %s1502
          %s1504 = sshll.u32 %s1501, 4
          %s1505 = int_to_ptr.hbm [resolvable:$true] %s1504
          %1510 = dma.vmem_to_hbm [thread:$0]  %s1503, 256, %s1505, %s1458, 64, 64, 4
        $region52: #{tpu_custom_call.1} parent=43 // pred_fallthru
          _
        // Predicated region
        $region53: #{tpu_custom_call.1} parent=43 // pred_check
          %p1511 = pneg %p255
        $region54: #{tpu_custom_call.1} parent=43 // pred_check_branch
          %1513 = sbr.rel (%p1511) target = $region56
        $region55: #{tpu_custom_call.1} parent=43 // pred_region
          %s1514 = smul.u32 8, %s32
        $region56: #{tpu_custom_call.1} parent=43 // pred_fallthru
          _
        // Predicated region
        $region57: #{tpu_custom_call.1} parent=43 // pred_check
          %p1515 = pneg %p283
        $region58: #{tpu_custom_call.1} parent=43 // pred_check_branch
          %1517 = sbr.rel (%p1515) target = $region60
        $region59: #{tpu_custom_call.1} parent=43 // pred_region
          %1519 = vsyncadd %s1472, 0
          %s1520 = sadd.s32 %s32, %s31
          %s1521 = scalar_lea.hbm %s9, %s1520
          %s1523 = sshll.u32 %s1474, 4
          %s1524 = int_to_ptr.vmem [resolvable:$true] %s1523
          %s1525 = sshll.u32 %s1521, 4
          %s1526 = int_to_ptr.hbm [resolvable:$true] %s1525
          %1528 = dma.vmem_to_hbm [thread:$0]  %s1524, 16, %s1526, %s1472
        $region60: #{tpu_custom_call.1} parent=43 // pred_fallthru
          _
      $region44: #{tpu_custom_call.1} parent=5 // pred_fallthru
        _
      %p1529 = scmp.le.s32.totalorder 2, %s22
      // Predicated region
      $region61: #{tpu_custom_call.1} parent=5 // pred_check
        %p1530 = pneg %p1529
      $region62: #{tpu_custom_call.1} parent=5 // pred_check_branch
        %1532 = sbr.rel (%p1530) target = $region64
      $region63: #{tpu_custom_call.1} parent=5 // pred_region
        %s1533 = ssub.s32 %s22, 2
        // Predicated region
        $region65: #{tpu_custom_call.1} parent=63 // pred_check
          %p1534 = pneg %p205
        $region66: #{tpu_custom_call.1} parent=63 // pred_check_branch
          %1536 = sbr.rel (%p1534) target = $region68
        $region67: #{tpu_custom_call.1} parent=63 // pred_region
          %s1537 = sand.u32 %s190, 1
          %s1538 = scalar_lea.sflag [#allocation3], %s1537
          %s1539 = sand.u32 %s190, 1
          %s1540 = smul.addr %s1539, 16
          %s1541 = scalar_lea.vmem [#allocation2], %s1540
          %1543 = dma.done %s1538, 256
        $region68: #{tpu_custom_call.1} parent=63 // pred_fallthru
          _
        // Predicated region
        $region69: #{tpu_custom_call.1} parent=63 // pred_check
          %p1544 = pneg %p233
        $region70: #{tpu_custom_call.1} parent=63 // pred_check_branch
          %1546 = sbr.rel (%p1544) target = $region72
        $region71: #{tpu_custom_call.1} parent=63 // pred_region
          %s1547 = sand.u32 %s28, 1
          %s1548 = scalar_lea.sflag [#allocation5], %s1547
          %s1549 = sand.u32 %s218, 1
          %s1550 = smul.addr %s1549, 16
          %s1551 = scalar_lea.vmem [#allocation4], %s1550
          %1553 = dma.done %s1548, 256
        $region72: #{tpu_custom_call.1} parent=63 // pred_fallthru
          _
        // Predicated region
        $region73: #{tpu_custom_call.1} parent=63 // pred_check
          %p1554 = pneg %p261
        $region74: #{tpu_custom_call.1} parent=63 // pred_check_branch
          %1556 = sbr.rel (%p1554) target = $region76
        $region75: #{tpu_custom_call.1} parent=63 // pred_region
          %s1557 = smul.u32 8, %s34
          %p1558 = scmp.lt.s32.totalorder %s33, 1
          %s1559 = scalar_select %p1558, %s33, 1
          %p1560 = scmp.lt.s32.totalorder %s1557, 7
          %s1561 = scalar_select %p1560, %s1557, 7
          %s1562 = smul.addr %s1559, 8
          %s1563 = sadd.s32 %s1561, %s1562
          %s1564 = smul.addr %s1563, 8
          %s1565 = scalar_lea.vmem %s8, %s1564
        $region76: #{tpu_custom_call.1} parent=63 // pred_fallthru
          _
        // Predicated region
        $region77: #{tpu_custom_call.1} parent=63 // pred_check
          %p1566 = pneg %p289
        $region78: #{tpu_custom_call.1} parent=63 // pred_check_branch
          %1568 = sbr.rel (%p1566) target = $region80
        $region79: #{tpu_custom_call.1} parent=63 // pred_region
          %s1569 = sand.u32 %s28, 1
          %s1570 = scalar_lea.sflag [#allocation5], %s1569
          %s1571 = sand.u32 %s274, 1
          %s1572 = scalar_lea.vmem [#allocation6], %s1571
          %1574 = dma.done %s1570, 16
        $region80: #{tpu_custom_call.1} parent=63 // pred_fallthru
          _
      $region64: #{tpu_custom_call.1} parent=5 // pred_fallthru
        _
    $region6: #{tpu_custom_call.1} parent=1 // loop_footer
      %s26 = sadd.s32 1, %s22
    $region7: #{tpu_custom_call.1} parent=1 // loop_footer_branch
      %21 = sbr.rel target = $region3
    $region8: #{tpu_custom_call.1} parent=1 // loop_exit
      _
    %1575 = vsyncpa [#allocation3], 1
    %s1576 = scalar_lea.sflag [#allocation3], 1
    %1577 = vsyncpa %s1576, 1
    %1578 = vsyncpa [#allocation5], 1
    %s1579 = scalar_lea.sflag [#allocation5], 1
    %1580 = vsyncpa %s1579, 1

</llo_original>
